<compile_context>
chip_gen: v5e
topology: v5e:2x2
jax: 0.10.0
libtpu: 0.0.40
codegen_flags: <defaults>
</compile_context>

<pallas_src>
import copy
import functools

import numpy as np

import jax
import jax.numpy as jnp
from jax.experimental import pallas as pl
from jax.experimental.pallas import tpu as pltpu


# ----------------------------------------------------------------------------
# Pallas kernels
# ----------------------------------------------------------------------------

def _encoder_kernel(x_ref, wb_ref, bb_ref, wi_ref, wh_ref, bx_ref, bhn_ref,
                    bv_ref, hh_ref, *, n_steps, batch):
    """Fused block_conv (k=1 Conv1d == matmul) + GRU over the whole sequence.

    Input-side work is hoisted out of the recurrence:
      bv_all = x @ Wb + bb        one (T*B, Cin) x (Cin, Hp)   matmul
      gx_all = bv_all @ Wi + bx   one (T*B, Hp)  x (Hp, 3*Hp)  matmul
    The serial loop only does gh = h @ Wh plus the gate math.  Gate blocks are
    128-lane padded (r|z|n at lane offsets 0/Hp/2Hp); padded lanes stay exactly 0.

    x_ref:  (T*B, Cin) time-major rows
    bv_ref: (T*B, Hp)  block_conv outputs (needed later by the decoder)
    hh_ref: (B, Hp)    last hidden state
    """
    Hp = hh_ref.shape[1]

    bv_all = (jnp.dot(x_ref[...], wb_ref[...], preferred_element_type=jnp.float32)
              + bb_ref[...])                                              # (T*B, Hp)
    bv_ref[...] = bv_all                                                  # lane-dense store
    gx_all = (jnp.dot(bv_all, wi_ref[...], preferred_element_type=jnp.float32)
              + bx_ref[...])                                              # (T*B, 3*Hp)

    bhn = bhn_ref[...]
    h = jnp.zeros(hh_ref.shape, jnp.float32)
    # n_steps is small and static; a fully-unrolled static loop keeps all slicing static.
    # (For large T this should become a fori_loop over a (T, B, 3Hp) VMEM scratch instead.)
    for t in range(n_steps):
        gx = gx_all[t * batch:(t + 1) * batch, :]
        gh = jnp.dot(h, wh_ref[...], preferred_element_type=jnp.float32)
        r = jax.nn.sigmoid(gx[:, :Hp] + gh[:, :Hp])
        z = jax.nn.sigmoid(gx[:, Hp:2 * Hp] + gh[:, Hp:2 * Hp])
        n = jnp.tanh(gx[:, 2 * Hp:] + r * (gh[:, 2 * Hp:] + bhn))
        h = (1.0 - z) * n + z * h
    hh_ref[...] = h


@jax.jit
def encoder_forward(blocks, wb, bb, wi, wh, bx, bhn):
    """blocks: (B, Cin, N) NCL layout.  Returns (block_vec (N*B, Hp), last_hh (B, Hp))."""
    B, Cin, N = blocks.shape
    Hp = wb.shape[1]
    x2 = jnp.transpose(blocks, (2, 0, 1)).reshape(N * B, Cin).astype(jnp.float32)
    kernel = functools.partial(_encoder_kernel, n_steps=N, batch=B)
    vmem = pl.BlockSpec(memory_space=pltpu.MemorySpace.VMEM)
    return pl.pallas_call(
        kernel,
        in_specs=[vmem] * 7,
        out_specs=(vmem, vmem),
        out_shape=(jax.ShapeDtypeStruct((N * B, Hp), jnp.float32),
                   jax.ShapeDtypeStruct((B, Hp), jnp.float32)),
    )(x2, wb, bb, wi, wh, bx, bhn)


def _decoder_kernel(hm_ref, enc_ref, bvt_ref, h_ref, whc_ref, wdi_ref, fcw_ref, b_ref,
                    hnew_ref, out_ref, *, lg=True):
    """One fused decode step:
         height_map conv + split-input GRU cell + fc1/ReLU/fc2 + log(max softmax) + argmax.

    Consolidated operands (trims per-step dispatch cost):
      wdi_ref : (4, Dp, 3*Dp)   stacked [W_enc | W_bv | W_hv | W_h] fused gate weights
      fcw_ref : (2, Dp, Dp)     stacked [fc1_w | fc2_w] (fc2 cols >= container_width are 0)
      b_ref   : (1, HHp + 6*Dp) [bhc | bdx(3*Dp) | bdhn | b1 | b2] - 128-lane aligned slices;
                                b2 holds -1e30 on padded logit lanes
    Outputs: hnew (B, Dp) [aliased with h_ref's HBM buffer], packed (B, 2) = [logp, argmax].
    """
    HHp = whc_ref.shape[1]
    Dp = h_ref.shape[1]

    bhc = b_ref[:, 0:HHp]
    bdx = b_ref[:, HHp:HHp + 3 * Dp]
    bdhn = b_ref[:, HHp + 3 * Dp:HHp + 4 * Dp]
    b1 = b_ref[:, HHp + 4 * Dp:HHp + 5 * Dp]
    b2 = b_ref[:, HHp + 5 * Dp:HHp + 6 * Dp]

    # Height-map conv (k=1 Conv1d == matmul).
    hv = jnp.dot(hm_ref[...], whc_ref[...], preferred_element_type=jnp.float32) + bhc

    # Split-input fused GRU gates: no lane-axis concat, everything stays 128-lane aligned.
    h = h_ref[...]
    gx = jnp.dot(enc_ref[...], wdi_ref[0], preferred_element_type=jnp.float32)
    if lg:
        gx = gx + jnp.dot(bvt_ref[...], wdi_ref[1], preferred_element_type=jnp.float32)
    gx = gx + jnp.dot(hv, wdi_ref[2], preferred_element_type=jnp.float32) + bdx
    gh = jnp.dot(h, wdi_ref[3], preferred_element_type=jnp.float32)
    r = jax.nn.sigmoid(gx[:, :Dp] + gh[:, :Dp])
    z = jax.nn.sigmoid(gx[:, Dp:2 * Dp] + gh[:, Dp:2 * Dp])
    n = jnp.tanh(gx[:, 2 * Dp:] + r * (gh[:, 2 * Dp:] + bdhn))
    h_new = (1.0 - z) * n + z * h
    hnew_ref[...] = h_new

    t1 = jax.nn.relu(jnp.dot(h_new, fcw_ref[0], preferred_element_type=jnp.float32) + b1)
    logits = jnp.dot(t1, fcw_ref[1], preferred_element_type=jnp.float32) + b2    # (B, Dp)

    # log(max softmax) = max(logits) - logsumexp(logits); argmax(softmax) == argmax(logits).
    m = jnp.max(logits, axis=1, keepdims=True)
    lse = m + jnp.log(jnp.sum(jnp.exp(logits - m), axis=1, keepdims=True))
    logp = m - lse
    lane = jax.lax.broadcasted_iota(jnp.int32, logits.shape, 1)
    first_max = jnp.min(jnp.where(logits == m, lane, logits.shape[1]),
                        axis=1, keepdims=True)                                   # first argmax
    out_ref[...] = jnp.concatenate([logp, first_max.astype(jnp.float32)], axis=1)


@functools.partial(jax.jit, static_argnames=("lg",))
def decoder_forward(idx, hm, enc_hh, block_vec, h_prev,
                    whc, wdi_all, fc_w, bias_all, *, lg=True):
    B, Dp = h_prev.shape
    # Only the needed block_vec timestep feeds the kernel (one (B, Hp) row slab).
    bvt = jax.lax.dynamic_slice_in_dim(block_vec, idx * B, B, axis=0)
    kernel = functools.partial(_decoder_kernel, lg=lg)
    vmem = pl.BlockSpec(memory_space=pltpu.MemorySpace.VMEM)
    return pl.pallas_call(
        kernel,
        in_specs=[vmem] * 8,
        out_specs=(vmem, vmem),
        out_shape=(jax.ShapeDtypeStruct((B, Dp), jnp.float32),
                   jax.ShapeDtypeStruct((B, 2), jnp.float32)),
        input_output_aliases={3: 0},     # donate h_prev's buffer to the new hidden state
    )(hm, enc_hh, bvt, h_prev, whc, wdi_all, fc_w, bias_all)


# ----------------------------------------------------------------------------
# Host-side packing simulation (identical semantics to the PyTorch reference)
# ----------------------------------------------------------------------------

def is_stable_2d(support, obj_left, obj_width):
    object_center = obj_left + obj_width / 2
    left_index = obj_left
    right_index = obj_left + obj_width
    for left in support:
        if left <= 0:
            left_index += 1
        else:
            break
    for right in reversed(support):
        if right <= 0:
            right_index -= 1
        else:
            break
    if left_index + 1 == right_index and obj_width == 1:
        return True
    if object_center <= left_index or object_center >= right_index:
        return False
    return True


def add_block(block, pos_x, container, height_map, stable, current_blocks_num,
              is_train=True):
    container_width, container_height = container.shape
    block_width, block_height = block
    block_width = int(block_width)
    block_height = int(block_height)
    pos_x = int(pos_x)
    if is_train is False:
        while pos_x + block_width > container_width:
            pos_x -= 1
    pos_z = int(height_map[pos_x:pos_x + block_width].max())
    block_id = int(current_blocks_num + 1)
    if pos_x + block_width <= container_width:
        support = container[pos_x:pos_x + block_width, pos_z - 1]
        if pos_z == 0:
            stable[block_id - 1] = True
        else:
            stable[block_id - 1] = is_stable_2d(support, pos_x, block_width)
        container[pos_x:pos_x + block_width, pos_z:pos_z + block_height] = block_id
        under_block = container[pos_x:pos_x + block_width, :pos_z]
        container[pos_x:pos_x + block_width, :pos_z][under_block == 0] = -1
        height_map[pos_x:pos_x + block_width] = \
            height_map[pos_x:pos_x + block_width].max() + block_height
    else:
        pos_x = container_width
        stable[block_id - 1] = False
    if block_width != 0:
        current_blocks_num += 1
    box_size = height_map.max() * container_width
    valid_size = (container >= 1).sum()
    py_size = (container != 0).sum()
    empty_size = py_size - valid_size
    return (container, height_map, stable, box_size, valid_size, empty_size,
            (pos_x, pos_z), current_blocks_num)


class PackEngine:
    def __init__(self, container_width, container_height, max_blocks_num, is_train=True):
        self.container_width = container_width
        self.container_height = container_height
        self.height_map = np.zeros(container_width)
        self.container = np.zeros((container_width, container_height))
        self.nb_actions = container_width
        self.score = 0
        self.time = 0
        self.num_blocks = 0
        self.max_blocks_num = max_blocks_num
        self.positions = []
        self.blocks = []
        self.stable = [False for _ in range(max_blocks_num)]
        self.clear()
        self.is_train = is_train
        self.reward = 0

    def step(self, action, block):
        block = np.asarray(block).astype(np.int64)
        action = int(action)
        while action + block[0] > self.container_width:
            action -= 1
        (self.container, self.height_map, self.stable, box_size, valid_size,
         empty_size, pos, self.num_blocks) = add_block(
            block, action, self.container, self.height_map, self.stable,
            self.num_blocks)
        C = 0 if box_size == 0 else valid_size / box_size
        P = 0 if (valid_size + empty_size) == 0 else valid_size / (valid_size + empty_size)
        S = 0 if self.num_blocks == 0 else np.sum(self.stable) / self.num_blocks
        reward = (C + P + S) / 3
        if block[0] != 0:
            self.blocks.append(np.copy(block))
            self.positions.append(pos)
        self.time += 1
        done = False
        if self.time == self.max_blocks_num:
            self.clear()
            done = True
        state = np.copy(self.height_map)
        return state, reward, done, pos

    def clear(self):
        self.time = 0
        self.score = 0
        self.num_blocks = 0
        self.blocks = []
        self.positions = []
        self.height_map = np.zeros_like(self.height_map)
        self.container = np.zeros((self.container_width, self.container_height))
        self.stable = [False for _ in range(self.max_blocks_num)]
        return self.height_map


# ----------------------------------------------------------------------------
# Parameter init (deterministic, synthetic), 128-lane padded fused layouts
# ----------------------------------------------------------------------------

def _round_up(x, m=128):
    return ((x + m - 1) // m) * m


def _pad_to(x, shape, value=0.0):
    pads = [(0, s - d) for d, s in zip(x.shape, shape)]
    return jnp.pad(x, pads, constant_values=value)


def _init_linear_padded(key, in_dim, out_dim, in_pad=None, out_pad=None,
                        scale=0.1, bias_pad_value=0.0):
    in_pad = in_dim if in_pad is None else in_pad
    out_pad = out_dim if out_pad is None else out_pad
    kw, kb = jax.random.split(key)
    w = scale * jax.random.normal(kw, (in_dim, out_dim), jnp.float32)
    b = scale * jax.random.normal(kb, (1, out_dim), jnp.float32)
    return _pad_to(w, (in_pad, out_pad)), _pad_to(b, (1, out_pad), bias_pad_value)


def _init_gru_split_padded(key, in_dims, in_pads, hid_dim, hid_pad, scale=0.1):
    """GRU cell params with the input split into pieces and each gate block (r|z|n) padded
    to `hid_pad` lanes so in-kernel gate slices are 128-lane aligned.
    Returns: ([wi_piece_p (in_pads[p], 3*hid_pad)], wh (hid_pad, 3*hid_pad),
              bx (1, 3*hid_pad) = [bir+bhr | biz+bhz | bin],  bhn (1, hid_pad))."""
    n_p = len(in_dims)
    keys = iter(jax.random.split(key, 3 * n_p + 9))

    def nrm(shape):
        return scale * jax.random.normal(next(keys), shape, jnp.float32)

    wi_pieces = [
        jnp.concatenate([_pad_to(nrm((in_dims[p], hid_dim)), (in_pads[p], hid_pad))
                         for _ in range(3)], axis=1)
        for p in range(n_p)]
    wh = jnp.concatenate([_pad_to(nrm((hid_dim, hid_dim)), (hid_pad, hid_pad))
                          for _ in range(3)], axis=1)
    bi = [_pad_to(nrm((1, hid_dim)), (1, hid_pad)) for _ in range(3)]
    bh = [_pad_to(nrm((1, hid_dim)), (1, hid_pad)) for _ in range(3)]
    bx = jnp.concatenate([bi[0] + bh[0], bi[1] + bh[1], bi[2]], axis=1)
    return wi_pieces, wh, bx, bh[2]


# ----------------------------------------------------------------------------
# PackRNN (JAX/Pallas version)
# ----------------------------------------------------------------------------

class PackRNNPallas:
    def __init__(self, block_input_size, block_hidden_size, height_input_size,
                 height_hidden_size, container_width, container_height,
                 heightmap_type, max_blocks_num=10, pack_net_type='LG', key=None):
        lg = (pack_net_type == 'LG')
        if lg:
            decoder_hidden_size = 2 * block_hidden_size + height_hidden_size
        else:
            decoder_hidden_size = block_hidden_size + height_hidden_size
        self.block_hidden_size = block_hidden_size
        self.height_hidden_size = height_hidden_size
        self.decoder_hidden_size = decoder_hidden_size
        self.container_width = container_width
        self.container_height = container_height
        self.max_blocks_num = max_blocks_num
        self.heightmap_type = heightmap_type
        self.pack_net_type = pack_net_type
        self.engines = None

        BHp = _round_up(block_hidden_size)
        HHp = _round_up(height_hidden_size)
        Dp = _round_up(decoder_hidden_size)
        # The decoder kernel stacks wdi_enc/wdi_bv/wdi_hv/wdh into one operand, so all
        # padded row widths must agree (true whenever every hidden dim <= 128).
        assert BHp == HHp == Dp, "stacked decoder weights need equal 128-padded widths"
        assert container_width <= Dp
        self.block_hidden_pad = BHp
        self.decoder_hidden_pad = Dp

        keys = jax.random.split(key, 6)
        # block_conv: Conv1d(k=1) == per-position Linear; output 128-lane padded.
        self.block_conv = _init_linear_padded(keys[0], block_input_size,
                                              block_hidden_size, out_pad=BHp)
        if heightmap_type == 'diff':
            # TODO(synk): heightmap_type='diff' preprocessing not implemented; only
            # 'full' / 'zero' are supported by forward().
            h_in = height_input_size - 1
        else:
            h_in = height_input_size
        whc, bhc = _init_linear_padded(keys[1], h_in, height_hidden_size, out_pad=HHp)
        self.height_conv_w = whc

        # Encoder GRU (single input piece = block_vec).
        enc_wi, enc_wh, enc_bx, enc_bhn = _init_gru_split_padded(
            keys[2], [block_hidden_size], [BHp], block_hidden_size, BHp)
        self.enc_wi, self.enc_wh = enc_wi[0], enc_wh
        self.enc_bx, self.enc_bhn = enc_bx, enc_bhn

        # Decoder GRU with split input pieces [enc | (bv) | hv] (no lane concat in-kernel).
        if lg:
            in_dims = [block_hidden_size, block_hidden_size, height_hidden_size]
            in_pads = [BHp, BHp, HHp]
        else:
            in_dims = [block_hidden_size, height_hidden_size]
            in_pads = [BHp, HHp]
        dec_wi, dec_wh, dec_bx, dec_bhn = _init_gru_split_padded(
            keys[3], in_dims, in_pads, decoder_hidden_size, Dp)
        if lg:
            wdi_enc, wdi_bv, wdi_hv = dec_wi
        else:
            wdi_enc, wdi_hv = dec_wi
            wdi_bv = jnp.zeros((BHp, 3 * Dp), jnp.float32)
        self.dec_wdi_all = jnp.stack([wdi_enc, wdi_bv, wdi_hv, dec_wh])    # (4, Dp, 3*Dp)

        w1, b1 = _init_linear_padded(keys[4], decoder_hidden_size, decoder_hidden_size,
                                     in_pad=Dp, out_pad=Dp)
        # Padded logit lanes get a -1e30 bias so max/argmax/logsumexp ignore them.
        w2, b2 = _init_linear_padded(keys[5], decoder_hidden_size, container_width,
                                     in_pad=Dp, out_pad=Dp, bias_pad_value=-1e30)
        self.dec_fc_w = jnp.stack([w1, w2])                                # (2, Dp, Dp)
        # All decoder biases consolidated into one lane-dense operand; slice offsets are
        # multiples of 128: [bhc | bdx(3*Dp) | bdhn | b1 | b2].
        self.dec_bias_all = jnp.concatenate([bhc, dec_bx, dec_bhn, b1, b2], axis=1)

    def forward(self, blocks, blocks_num):
        """blocks: (batch, block_input_size, blocks_num) float32 (NCL, like PyTorch)."""
        assert self.heightmap_type in ('full', 'zero'), "heightmap_type='diff' not supported"
        B = int(blocks.shape[0])
        lg = (self.pack_net_type == 'LG')
        Dp = self.decoder_hidden_pad

        if self.engines is None:
            self.engines = [PackEngine(self.container_width, self.container_height,
                                       self.max_blocks_num, False) for _ in range(B)]
        else:
            for e in self.engines:
                e.clear()

        # Fused block_conv + encoder GRU in a single pallas_call over the whole sequence.
        block_vec, enc_hh = encoder_forward(blocks, *self.block_conv,
                                            self.enc_wi, self.enc_wh,
                                            self.enc_bx, self.enc_bhn)
        # block_vec: (N*B, BHp) time-major rows; enc_hh: (B, BHp)
        # TODO(synk): nn.Dropout(p=0.1) on encoder_last_hh treated as identity (eval mode).

        blocks_np = np.asarray(blocks).transpose(0, 2, 1)                  # (B, N, 2)
        positions = np.zeros(blocks_np.shape)
        height_map = np.zeros((B, self.container_width), dtype=np.float32)
        rw = np.zeros(B)
        logp_cols = []
        last_hh = jnp.zeros((B, Dp), jnp.float32)

        for block_index in range(blocks_num):
            hm = jnp.asarray(height_map)                                   # (B, CW)
            # One fused kernel per decode step: height_conv + split-input GRU + fc + argmax.
            # Returns the new hidden state and a packed (B, 2) = [log(max softmax), argmax],
            # so the per-step host sync transfers the minimum possible.
            last_hh, packed = decoder_forward(
                block_index, hm, enc_hh, block_vec, last_hh,
                self.height_conv_w, self.dec_wdi_all, self.dec_fc_w, self.dec_bias_all,
                lg=lg)

            packed_np = np.asarray(packed)                                 # host sync
            logp_cols.append(packed_np[:, 0:1])
            for b in range(B):
                block = blocks_np[b][block_index]
                action = int(packed_np[b, 1])
                _, rw[b], _, pos = self.engines[b].step(action, block)
                positions[b][block_index] = pos
                hm_b = copy.deepcopy(self.engines[b].height_map)
                if self.heightmap_type == 'zero':
                    hm_b = hm_b - np.min(hm_b)
                height_map[b][:] = hm_b

        reward = jnp.asarray(rw.astype(np.float32))
        hit_prob_log = jnp.asarray(np.concatenate(logp_cols, axis=1).astype(np.float32))
        return positions, hit_prob_log, -reward


# ----------------------------------------------------------------------------
# Main
# ----------------------------------------------------------------------------

if __name__ == "__main__":
    key = jax.random.PRNGKey(0)
    k_param, k_w, k_h = jax.random.split(key, 3)

    B = 2
    block_input_size = 2          # (w, h)
    block_hidden = 32
    height_hidden = 32
    container_width = 16
    container_height = 64
    blocks_num = 8

    model = PackRNNPallas(
        block_input_size=block_input_size,
        block_hidden_size=block_hidden,
        height_input_size=container_width,   # height map has container_width channels
        height_hidden_size=height_hidden,
        container_width=container_width,
        container_height=container_height,
        heightmap_type='full',
        max_blocks_num=blocks_num,
        pack_net_type='LG',
        key=k_param,
    )

    widths = jax.random.randint(k_w, (B, 1, blocks_num), 1, 5).astype(jnp.float32)
    heights = jax.random.randint(k_h, (B, 1, blocks_num), 1, 5).astype(jnp.float32)
    blocks = jnp.concatenate([widths, heights], axis=1)   # (B, 2, blocks_num)

    positions, hit_prob_log, neg_reward = model.forward(blocks, blocks_num)
    jax.block_until_ready((hit_prob_log, neg_reward))
    assert positions.shape == (B, blocks_num, 2)
    assert hit_prob_log.shape == (B, blocks_num)
    assert neg_reward.shape == (B,)
    print("KERNEL_OK")
</pallas_src>

<mosaic_0001>
module attributes {stable_mosaic.version = 11 : i64} {
  func.func @_encoder_kernel(%arg0: memref<16x2xf32, #tpu.memory_space<vmem>>, %arg1: memref<2x128xf32, #tpu.memory_space<vmem>>, %arg2: memref<1x128xf32, #tpu.memory_space<vmem>>, %arg3: memref<128x384xf32, #tpu.memory_space<vmem>>, %arg4: memref<128x384xf32, #tpu.memory_space<vmem>>, %arg5: memref<1x384xf32, #tpu.memory_space<vmem>>, %arg6: memref<1x128xf32, #tpu.memory_space<vmem>>, %arg7: memref<16x128xf32, #tpu.memory_space<vmem>>, %arg8: memref<2x128xf32, #tpu.memory_space<vmem>>) attributes {dimension_semantics = [], scalar_prefetch = 0 : i64, scratch_operands = 0 : i64, tpu.core_type = #tpu.core_type<tc>} {
    %c0 = arith.constant 0 : index
    %c0_0 = arith.constant 0 : index
    %0 = vector.load %arg0[%c0, %c0_0] : memref<16x2xf32, #tpu.memory_space<vmem>>, vector<16x2xf32>
    %c0_1 = arith.constant 0 : index
    %c0_2 = arith.constant 0 : index
    %1 = vector.load %arg1[%c0_1, %c0_2] : memref<2x128xf32, #tpu.memory_space<vmem>>, vector<2x128xf32>
    %cst = arith.constant dense<0.000000e+00> : vector<16x128xf32>
    %2 = tpu.matmul %0, %1, %cst {dimension_numbers = #tpu.dot_dimension_numbers<[1], [0], [0], [1], [0, 0, 1, 1], [], []>} : vector<16x2xf32>, vector<2x128xf32>, vector<16x128xf32> -> vector<16x128xf32>
    %c0_3 = arith.constant 0 : index
    %c0_4 = arith.constant 0 : index
    %3 = vector.load %arg2[%c0_3, %c0_4] : memref<1x128xf32, #tpu.memory_space<vmem>>, vector<1x128xf32>
    %4 = vector.broadcast %3 : vector<1x128xf32> to vector<16x128xf32>
    %5 = arith.addf %2, %4 : vector<16x128xf32>
    %c0_5 = arith.constant 0 : index
    %c0_6 = arith.constant 0 : index
    %6 = vector.load %arg7[%c0_5, %c0_6] : memref<16x128xf32, #tpu.memory_space<vmem>>, vector<16x128xf32>
    tpu.vector_store %arg7[%c0_5, %c0_6], %5 {strides = array<i32>} : memref<16x128xf32, #tpu.memory_space<vmem>>, vector<16x128xf32>,
    %c0_7 = arith.constant 0 : index
    %c0_8 = arith.constant 0 : index
    %7 = vector.load %arg3[%c0_7, %c0_8] : memref<128x384xf32, #tpu.memory_space<vmem>>, vector<128x384xf32>
    %cst_9 = arith.constant dense<0.000000e+00> : vector<16x384xf32>
    %8 = tpu.matmul %5, %7, %cst_9 {dimension_numbers = #tpu.dot_dimension_numbers<[1], [0], [0], [1], [0, 0, 1, 1], [], []>} : vector<16x128xf32>, vector<128x384xf32>, vector<16x384xf32> -> vector<16x384xf32>
    %c0_10 = arith.constant 0 : index
    %c0_11 = arith.constant 0 : index
    %9 = vector.load %arg5[%c0_10, %c0_11] : memref<1x384xf32, #tpu.memory_space<vmem>>, vector<1x384xf32>
    %10 = vector.broadcast %9 : vector<1x384xf32> to vector<16x384xf32>
    %11 = arith.addf %8, %10 : vector<16x384xf32>
    %c0_12 = arith.constant 0 : index
    %c0_13 = arith.constant 0 : index
    %12 = vector.load %arg6[%c0_12, %c0_13] : memref<1x128xf32, #tpu.memory_space<vmem>>, vector<1x128xf32>
    %cst_14 = arith.constant 0.000000e+00 : f32
    %13 = vector.broadcast %cst_14 : f32 to vector<2x128xf32>
    %14 = vector.extract_strided_slice %11 {offsets = [0, 0], sizes = [2, 384], strides = [1, 1]} : vector<16x384xf32> to vector<2x384xf32>
    %c0_15 = arith.constant 0 : index
    %c0_16 = arith.constant 0 : index
    %15 = vector.load %arg4[%c0_15, %c0_16] : memref<128x384xf32, #tpu.memory_space<vmem>>, vector<128x384xf32>
    %cst_17 = arith.constant dense<0.000000e+00> : vector<2x384xf32>
    %16 = tpu.matmul %13, %15, %cst_17 {dimension_numbers = #tpu.dot_dimension_numbers<[1], [0], [0], [1], [0, 0, 1, 1], [], []>} : vector<2x128xf32>, vector<128x384xf32>, vector<2x384xf32> -> vector<2x384xf32>
    %17 = vector.extract_strided_slice %14 {offsets = [0, 0], sizes = [2, 128], strides = [1, 1]} : vector<2x384xf32> to vector<2x128xf32>
    %18 = vector.extract_strided_slice %16 {offsets = [0, 0], sizes = [2, 128], strides = [1, 1]} : vector<2x384xf32> to vector<2x128xf32>
    %19 = arith.addf %17, %18 : vector<2x128xf32>
    %20 = arith.negf %19 : vector<2x128xf32>
    %21 = math.exp %20 : vector<2x128xf32>
    %cst_18 = arith.constant 1.000000e+00 : f32
    %22 = vector.broadcast %cst_18 : f32 to vector<2x128xf32>
    %23 = arith.addf %22, %21 : vector<2x128xf32>
    %24 = arith.divf %22, %23 : vector<2x128xf32>
    %25 = vector.extract_strided_slice %14 {offsets = [0, 128], sizes = [2, 128], strides = [1, 1]} : vector<2x384xf32> to vector<2x128xf32>
    %26 = vector.extract_strided_slice %16 {offsets = [0, 128], sizes = [2, 128], strides = [1, 1]} : vector<2x384xf32> to vector<2x128xf32>
    %27 = arith.addf %25, %26 : vector<2x128xf32>
    %28 = arith.negf %27 : vector<2x128xf32>
    %29 = math.exp %28 : vector<2x128xf32>
    %cst_19 = arith.constant 1.000000e+00 : f32
    %30 = vector.broadcast %cst_19 : f32 to vector<2x128xf32>
    %31 = arith.addf %30, %29 : vector<2x128xf32>
    %32 = arith.divf %30, %31 : vector<2x128xf32>
    %33 = vector.extract_strided_slice %14 {offsets = [0, 256], sizes = [2, 128], strides = [1, 1]} : vector<2x384xf32> to vector<2x128xf32>
    %34 = vector.extract_strided_slice %16 {offsets = [0, 256], sizes = [2, 128], strides = [1, 1]} : vector<2x384xf32> to vector<2x128xf32>
    %35 = vector.broadcast %12 : vector<1x128xf32> to vector<2x128xf32>
    %36 = arith.addf %34, %35 : vector<2x128xf32>
    %37 = arith.mulf %24, %36 : vector<2x128xf32>
    %38 = arith.addf %33, %37 : vector<2x128xf32>
    %39 = math.tanh %38 : vector<2x128xf32>
    %cst_20 = arith.constant 1.000000e+00 : f32
    %40 = vector.broadcast %cst_20 : f32 to vector<2x128xf32>
    %41 = arith.subf %40, %32 : vector<2x128xf32>
    %42 = arith.mulf %41, %39 : vector<2x128xf32>
    %43 = arith.mulf %32, %13 : vector<2x128xf32>
    %44 = arith.addf %42, %43 : vector<2x128xf32>
    %45 = vector.extract_strided_slice %11 {offsets = [2, 0], sizes = [2, 384], strides = [1, 1]} : vector<16x384xf32> to vector<2x384xf32>
    %c0_21 = arith.constant 0 : index
    %c0_22 = arith.constant 0 : index
    %46 = vector.load %arg4[%c0_21, %c0_22] : memref<128x384xf32, #tpu.memory_space<vmem>>, vector<128x384xf32>
    %cst_23 = arith.constant dense<0.000000e+00> : vector<2x384xf32>
    %47 = tpu.matmul %44, %46, %cst_23 {dimension_numbers = #tpu.dot_dimension_numbers<[1], [0], [0], [1], [0, 0, 1, 1], [], []>} : vector<2x128xf32>, vector<128x384xf32>, vector<2x384xf32> -> vector<2x384xf32>
    %48 = vector.extract_strided_slice %45 {offsets = [0, 0], sizes = [2, 128], strides = [1, 1]} : vector<2x384xf32> to vector<2x128xf32>
    %49 = vector.extract_strided_slice %47 {offsets = [0, 0], sizes = [2, 128], strides = [1, 1]} : vector<2x384xf32> to vector<2x128xf32>
    %50 = arith.addf %48, %49 : vector<2x128xf32>
    %51 = arith.negf %50 : vector<2x128xf32>
    %52 = math.exp %51 : vector<2x128xf32>
    %cst_24 = arith.constant 1.000000e+00 : f32
    %53 = vector.broadcast %cst_24 : f32 to vector<2x128xf32>
    %54 = arith.addf %53, %52 : vector<2x128xf32>
    %55 = arith.divf %53, %54 : vector<2x128xf32>
    %56 = vector.extract_strided_slice %45 {offsets = [0, 128], sizes = [2, 128], strides = [1, 1]} : vector<2x384xf32> to vector<2x128xf32>
    %57 = vector.extract_strided_slice %47 {offsets = [0, 128], sizes = [2, 128], strides = [1, 1]} : vector<2x384xf32> to vector<2x128xf32>
    %58 = arith.addf %56, %57 : vector<2x128xf32>
    %59 = arith.negf %58 : vector<2x128xf32>
    %60 = math.exp %59 : vector<2x128xf32>
    %cst_25 = arith.constant 1.000000e+00 : f32
    %61 = vector.broadcast %cst_25 : f32 to vector<2x128xf32>
    %62 = arith.addf %61, %60 : vector<2x128xf32>
    %63 = arith.divf %61, %62 : vector<2x128xf32>
    %64 = vector.extract_strided_slice %45 {offsets = [0, 256], sizes = [2, 128], strides = [1, 1]} : vector<2x384xf32> to vector<2x128xf32>
    %65 = vector.extract_strided_slice %47 {offsets = [0, 256], sizes = [2, 128], strides = [1, 1]} : vector<2x384xf32> to vector<2x128xf32>
    %66 = vector.broadcast %12 : vector<1x128xf32> to vector<2x128xf32>
    %67 = arith.addf %65, %66 : vector<2x128xf32>
    %68 = arith.mulf %55, %67 : vector<2x128xf32>
    %69 = arith.addf %64, %68 : vector<2x128xf32>
    %70 = math.tanh %69 : vector<2x128xf32>
    %cst_26 = arith.constant 1.000000e+00 : f32
    %71 = vector.broadcast %cst_26 : f32 to vector<2x128xf32>
    %72 = arith.subf %71, %63 : vector<2x128xf32>
    %73 = arith.mulf %72, %70 : vector<2x128xf32>
    %74 = arith.mulf %63, %44 : vector<2x128xf32>
    %75 = arith.addf %73, %74 : vector<2x128xf32>
    %76 = vector.extract_strided_slice %11 {offsets = [4, 0], sizes = [2, 384], strides = [1, 1]} : vector<16x384xf32> to vector<2x384xf32>
    %c0_27 = arith.constant 0 : index
    %c0_28 = arith.constant 0 : index
    %77 = vector.load %arg4[%c0_27, %c0_28] : memref<128x384xf32, #tpu.memory_space<vmem>>, vector<128x384xf32>
    %cst_29 = arith.constant dense<0.000000e+00> : vector<2x384xf32>
    %78 = tpu.matmul %75, %77, %cst_29 {dimension_numbers = #tpu.dot_dimension_numbers<[1], [0], [0], [1], [0, 0, 1, 1], [], []>} : vector<2x128xf32>, vector<128x384xf32>, vector<2x384xf32> -> vector<2x384xf32>
    %79 = vector.extract_strided_slice %76 {offsets = [0, 0], sizes = [2, 128], strides = [1, 1]} : vector<2x384xf32> to vector<2x128xf32>
    %80 = vector.extract_strided_slice %78 {offsets = [0, 0], sizes = [2, 128], strides = [1, 1]} : vector<2x384xf32> to vector<2x128xf32>
    %81 = arith.addf %79, %80 : vector<2x128xf32>
    %82 = arith.negf %81 : vector<2x128xf32>
    %83 = math.exp %82 : vector<2x128xf32>
    %cst_30 = arith.constant 1.000000e+00 : f32
    %84 = vector.broadcast %cst_30 : f32 to vector<2x128xf32>
    %85 = arith.addf %84, %83 : vector<2x128xf32>
    %86 = arith.divf %84, %85 : vector<2x128xf32>
    %87 = vector.extract_strided_slice %76 {offsets = [0, 128], sizes = [2, 128], strides = [1, 1]} : vector<2x384xf32> to vector<2x128xf32>
    %88 = vector.extract_strided_slice %78 {offsets = [0, 128], sizes = [2, 128], strides = [1, 1]} : vector<2x384xf32> to vector<2x128xf32>
    %89 = arith.addf %87, %88 : vector<2x128xf32>
    %90 = arith.negf %89 : vector<2x128xf32>
    %91 = math.exp %90 : vector<2x128xf32>
    %cst_31 = arith.constant 1.000000e+00 : f32
    %92 = vector.broadcast %cst_31 : f32 to vector<2x128xf32>
    %93 = arith.addf %92, %91 : vector<2x128xf32>
    %94 = arith.divf %92, %93 : vector<2x128xf32>
    %95 = vector.extract_strided_slice %76 {offsets = [0, 256], sizes = [2, 128], strides = [1, 1]} : vector<2x384xf32> to vector<2x128xf32>
    %96 = vector.extract_strided_slice %78 {offsets = [0, 256], sizes = [2, 128], strides = [1, 1]} : vector<2x384xf32> to vector<2x128xf32>
    %97 = vector.broadcast %12 : vector<1x128xf32> to vector<2x128xf32>
    %98 = arith.addf %96, %97 : vector<2x128xf32>
    %99 = arith.mulf %86, %98 : vector<2x128xf32>
    %100 = arith.addf %95, %99 : vector<2x128xf32>
    %101 = math.tanh %100 : vector<2x128xf32>
    %cst_32 = arith.constant 1.000000e+00 : f32
    %102 = vector.broadcast %cst_32 : f32 to vector<2x128xf32>
    %103 = arith.subf %102, %94 : vector<2x128xf32>
    %104 = arith.mulf %103, %101 : vector<2x128xf32>
    %105 = arith.mulf %94, %75 : vector<2x128xf32>
    %106 = arith.addf %104, %105 : vector<2x128xf32>
    %107 = vector.extract_strided_slice %11 {offsets = [6, 0], sizes = [2, 384], strides = [1, 1]} : vector<16x384xf32> to vector<2x384xf32>
    %c0_33 = arith.constant 0 : index
    %c0_34 = arith.constant 0 : index
    %108 = vector.load %arg4[%c0_33, %c0_34] : memref<128x384xf32, #tpu.memory_space<vmem>>, vector<128x384xf32>
    %cst_35 = arith.constant dense<0.000000e+00> : vector<2x384xf32>
    %109 = tpu.matmul %106, %108, %cst_35 {dimension_numbers = #tpu.dot_dimension_numbers<[1], [0], [0], [1], [0, 0, 1, 1], [], []>} : vector<2x128xf32>, vector<128x384xf32>, vector<2x384xf32> -> vector<2x384xf32>
    %110 = vector.extract_strided_slice %107 {offsets = [0, 0], sizes = [2, 128], strides = [1, 1]} : vector<2x384xf32> to vector<2x128xf32>
    %111 = vector.extract_strided_slice %109 {offsets = [0, 0], sizes = [2, 128], strides = [1, 1]} : vector<2x384xf32> to vector<2x128xf32>
    %112 = arith.addf %110, %111 : vector<2x128xf32>
    %113 = arith.negf %112 : vector<2x128xf32>
    %114 = math.exp %113 : vector<2x128xf32>
    %cst_36 = arith.constant 1.000000e+00 : f32
    %115 = vector.broadcast %cst_36 : f32 to vector<2x128xf32>
    %116 = arith.addf %115, %114 : vector<2x128xf32>
    %117 = arith.divf %115, %116 : vector<2x128xf32>
    %118 = vector.extract_strided_slice %107 {offsets = [0, 128], sizes = [2, 128], strides = [1, 1]} : vector<2x384xf32> to vector<2x128xf32>
    %119 = vector.extract_strided_slice %109 {offsets = [0, 128], sizes = [2, 128], strides = [1, 1]} : vector<2x384xf32> to vector<2x128xf32>
    %120 = arith.addf %118, %119 : vector<2x128xf32>
    %121 = arith.negf %120 : vector<2x128xf32>
    %122 = math.exp %121 : vector<2x128xf32>
    %cst_37 = arith.constant 1.000000e+00 : f32
    %123 = vector.broadcast %cst_37 : f32 to vector<2x128xf32>
    %124 = arith.addf %123, %122 : vector<2x128xf32>
    %125 = arith.divf %123, %124 : vector<2x128xf32>
    %126 = vector.extract_strided_slice %107 {offsets = [0, 256], sizes = [2, 128], strides = [1, 1]} : vector<2x384xf32> to vector<2x128xf32>
    %127 = vector.extract_strided_slice %109 {offsets = [0, 256], sizes = [2, 128], strides = [1, 1]} : vector<2x384xf32> to vector<2x128xf32>
    %128 = vector.broadcast %12 : vector<1x128xf32> to vector<2x128xf32>
    %129 = arith.addf %127, %128 : vector<2x128xf32>
    %130 = arith.mulf %117, %129 : vector<2x128xf32>
    %131 = arith.addf %126, %130 : vector<2x128xf32>
    %132 = math.tanh %131 : vector<2x128xf32>
    %cst_38 = arith.constant 1.000000e+00 : f32
    %133 = vector.broadcast %cst_38 : f32 to vector<2x128xf32>
    %134 = arith.subf %133, %125 : vector<2x128xf32>
    %135 = arith.mulf %134, %132 : vector<2x128xf32>
    %136 = arith.mulf %125, %106 : vector<2x128xf32>
    %137 = arith.addf %135, %136 : vector<2x128xf32>
    %138 = vector.extract_strided_slice %11 {offsets = [8, 0], sizes = [2, 384], strides = [1, 1]} : vector<16x384xf32> to vector<2x384xf32>
    %c0_39 = arith.constant 0 : index
    %c0_40 = arith.constant 0 : index
    %139 = vector.load %arg4[%c0_39, %c0_40] : memref<128x384xf32, #tpu.memory_space<vmem>>, vector<128x384xf32>
    %cst_41 = arith.constant dense<0.000000e+00> : vector<2x384xf32>
    %140 = tpu.matmul %137, %139, %cst_41 {dimension_numbers = #tpu.dot_dimension_numbers<[1], [0], [0], [1], [0, 0, 1, 1], [], []>} : vector<2x128xf32>, vector<128x384xf32>, vector<2x384xf32> -> vector<2x384xf32>
    %141 = vector.extract_strided_slice %138 {offsets = [0, 0], sizes = [2, 128], strides = [1, 1]} : vector<2x384xf32> to vector<2x128xf32>
    %142 = vector.extract_strided_slice %140 {offsets = [0, 0], sizes = [2, 128], strides = [1, 1]} : vector<2x384xf32> to vector<2x128xf32>
    %143 = arith.addf %141, %142 : vector<2x128xf32>
    %144 = arith.negf %143 : vector<2x128xf32>
    %145 = math.exp %144 : vector<2x128xf32>
    %cst_42 = arith.constant 1.000000e+00 : f32
    %146 = vector.broadcast %cst_42 : f32 to vector<2x128xf32>
    %147 = arith.addf %146, %145 : vector<2x128xf32>
    %148 = arith.divf %146, %147 : vector<2x128xf32>
    %149 = vector.extract_strided_slice %138 {offsets = [0, 128], sizes = [2, 128], strides = [1, 1]} : vector<2x384xf32> to vector<2x128xf32>
    %150 = vector.extract_strided_slice %140 {offsets = [0, 128], sizes = [2, 128], strides = [1, 1]} : vector<2x384xf32> to vector<2x128xf32>
    %151 = arith.addf %149, %150 : vector<2x128xf32>
    %152 = arith.negf %151 : vector<2x128xf32>
    %153 = math.exp %152 : vector<2x128xf32>
    %cst_43 = arith.constant 1.000000e+00 : f32
    %154 = vector.broadcast %cst_43 : f32 to vector<2x128xf32>
    %155 = arith.addf %154, %153 : vector<2x128xf32>
    %156 = arith.divf %154, %155 : vector<2x128xf32>
    %157 = vector.extract_strided_slice %138 {offsets = [0, 256], sizes = [2, 128], strides = [1, 1]} : vector<2x384xf32> to vector<2x128xf32>
    %158 = vector.extract_strided_slice %140 {offsets = [0, 256], sizes = [2, 128], strides = [1, 1]} : vector<2x384xf32> to vector<2x128xf32>
    %159 = vector.broadcast %12 : vector<1x128xf32> to vector<2x128xf32>
    %160 = arith.addf %158, %159 : vector<2x128xf32>
    %161 = arith.mulf %148, %160 : vector<2x128xf32>
    %162 = arith.addf %157, %161 : vector<2x128xf32>
    %163 = math.tanh %162 : vector<2x128xf32>
    %cst_44 = arith.constant 1.000000e+00 : f32
    %164 = vector.broadcast %cst_44 : f32 to vector<2x128xf32>
    %165 = arith.subf %164, %156 : vector<2x128xf32>
    %166 = arith.mulf %165, %163 : vector<2x128xf32>
    %167 = arith.mulf %156, %137 : vector<2x128xf32>
    %168 = arith.addf %166, %167 : vector<2x128xf32>
    %169 = vector.extract_strided_slice %11 {offsets = [10, 0], sizes = [2, 384], strides = [1, 1]} : vector<16x384xf32> to vector<2x384xf32>
    %c0_45 = arith.constant 0 : index
    %c0_46 = arith.constant 0 : index
    %170 = vector.load %arg4[%c0_45, %c0_46] : memref<128x384xf32, #tpu.memory_space<vmem>>, vector<128x384xf32>
    %cst_47 = arith.constant dense<0.000000e+00> : vector<2x384xf32>
    %171 = tpu.matmul %168, %170, %cst_47 {dimension_numbers = #tpu.dot_dimension_numbers<[1], [0], [0], [1], [0, 0, 1, 1], [], []>} : vector<2x128xf32>, vector<128x384xf32>, vector<2x384xf32> -> vector<2x384xf32>
    %172 = vector.extract_strided_slice %169 {offsets = [0, 0], sizes = [2, 128], strides = [1, 1]} : vector<2x384xf32> to vector<2x128xf32>
    %173 = vector.extract_strided_slice %171 {offsets = [0, 0], sizes = [2, 128], strides = [1, 1]} : vector<2x384xf32> to vector<2x128xf32>
    %174 = arith.addf %172, %173 : vector<2x128xf32>
    %175 = arith.negf %174 : vector<2x128xf32>
    %176 = math.exp %175 : vector<2x128xf32>
    %cst_48 = arith.constant 1.000000e+00 : f32
    %177 = vector.broadcast %cst_48 : f32 to vector<2x128xf32>
    %178 = arith.addf %177, %176 : vector<2x128xf32>
    %179 = arith.divf %177, %178 : vector<2x128xf32>
    %180 = vector.extract_strided_slice %169 {offsets = [0, 128], sizes = [2, 128], strides = [1, 1]} : vector<2x384xf32> to vector<2x128xf32>
    %181 = vector.extract_strided_slice %171 {offsets = [0, 128], sizes = [2, 128], strides = [1, 1]} : vector<2x384xf32> to vector<2x128xf32>
    %182 = arith.addf %180, %181 : vector<2x128xf32>
    %183 = arith.negf %182 : vector<2x128xf32>
    %184 = math.exp %183 : vector<2x128xf32>
    %cst_49 = arith.constant 1.000000e+00 : f32
    %185 = vector.broadcast %cst_49 : f32 to vector<2x128xf32>
    %186 = arith.addf %185, %184 : vector<2x128xf32>
    %187 = arith.divf %185, %186 : vector<2x128xf32>
    %188 = vector.extract_strided_slice %169 {offsets = [0, 256], sizes = [2, 128], strides = [1, 1]} : vector<2x384xf32> to vector<2x128xf32>
    %189 = vector.extract_strided_slice %171 {offsets = [0, 256], sizes = [2, 128], strides = [1, 1]} : vector<2x384xf32> to vector<2x128xf32>
    %190 = vector.broadcast %12 : vector<1x128xf32> to vector<2x128xf32>
    %191 = arith.addf %189, %190 : vector<2x128xf32>
    %192 = arith.mulf %179, %191 : vector<2x128xf32>
    %193 = arith.addf %188, %192 : vector<2x128xf32>
    %194 = math.tanh %193 : vector<2x128xf32>
    %cst_50 = arith.constant 1.000000e+00 : f32
    %195 = vector.broadcast %cst_50 : f32 to vector<2x128xf32>
    %196 = arith.subf %195, %187 : vector<2x128xf32>
    %197 = arith.mulf %196, %194 : vector<2x128xf32>
    %198 = arith.mulf %187, %168 : vector<2x128xf32>
    %199 = arith.addf %197, %198 : vector<2x128xf32>
    %200 = vector.extract_strided_slice %11 {offsets = [12, 0], sizes = [2, 384], strides = [1, 1]} : vector<16x384xf32> to vector<2x384xf32>
    %c0_51 = arith.constant 0 : index
    %c0_52 = arith.constant 0 : index
    %201 = vector.load %arg4[%c0_51, %c0_52] : memref<128x384xf32, #tpu.memory_space<vmem>>, vector<128x384xf32>
    %cst_53 = arith.constant dense<0.000000e+00> : vector<2x384xf32>
    %202 = tpu.matmul %199, %201, %cst_53 {dimension_numbers = #tpu.dot_dimension_numbers<[1], [0], [0], [1], [0, 0, 1, 1], [], []>} : vector<2x128xf32>, vector<128x384xf32>, vector<2x384xf32> -> vector<2x384xf32>
    %203 = vector.extract_strided_slice %200 {offsets = [0, 0], sizes = [2, 128], strides = [1, 1]} : vector<2x384xf32> to vector<2x128xf32>
    %204 = vector.extract_strided_slice %202 {offsets = [0, 0], sizes = [2, 128], strides = [1, 1]} : vector<2x384xf32> to vector<2x128xf32>
    %205 = arith.addf %203, %204 : vector<2x128xf32>
    %206 = arith.negf %205 : vector<2x128xf32>
    %207 = math.exp %206 : vector<2x128xf32>
    %cst_54 = arith.constant 1.000000e+00 : f32
    %208 = vector.broadcast %cst_54 : f32 to vector<2x128xf32>
    %209 = arith.addf %208, %207 : vector<2x128xf32>
    %210 = arith.divf %208, %209 : vector<2x128xf32>
    %211 = vector.extract_strided_slice %200 {offsets = [0, 128], sizes = [2, 128], strides = [1, 1]} : vector<2x384xf32> to vector<2x128xf32>
    %212 = vector.extract_strided_slice %202 {offsets = [0, 128], sizes = [2, 128], strides = [1, 1]} : vector<2x384xf32> to vector<2x128xf32>
    %213 = arith.addf %211, %212 : vector<2x128xf32>
    %214 = arith.negf %213 : vector<2x128xf32>
    %215 = math.exp %214 : vector<2x128xf32>
    %cst_55 = arith.constant 1.000000e+00 : f32
    %216 = vector.broadcast %cst_55 : f32 to vector<2x128xf32>
    %217 = arith.addf %216, %215 : vector<2x128xf32>
    %218 = arith.divf %216, %217 : vector<2x128xf32>
    %219 = vector.extract_strided_slice %200 {offsets = [0, 256], sizes = [2, 128], strides = [1, 1]} : vector<2x384xf32> to vector<2x128xf32>
    %220 = vector.extract_strided_slice %202 {offsets = [0, 256], sizes = [2, 128], strides = [1, 1]} : vector<2x384xf32> to vector<2x128xf32>
    %221 = vector.broadcast %12 : vector<1x128xf32> to vector<2x128xf32>
    %222 = arith.addf %220, %221 : vector<2x128xf32>
    %223 = arith.mulf %210, %222 : vector<2x128xf32>
    %224 = arith.addf %219, %223 : vector<2x128xf32>
    %225 = math.tanh %224 : vector<2x128xf32>
    %cst_56 = arith.constant 1.000000e+00 : f32
    %226 = vector.broadcast %cst_56 : f32 to vector<2x128xf32>
    %227 = arith.subf %226, %218 : vector<2x128xf32>
    %228 = arith.mulf %227, %225 : vector<2x128xf32>
    %229 = arith.mulf %218, %199 : vector<2x128xf32>
    %230 = arith.addf %228, %229 : vector<2x128xf32>
    %231 = vector.extract_strided_slice %11 {offsets = [14, 0], sizes = [2, 384], strides = [1, 1]} : vector<16x384xf32> to vector<2x384xf32>
    %c0_57 = arith.constant 0 : index
    %c0_58 = arith.constant 0 : index
    %232 = vector.load %arg4[%c0_57, %c0_58] : memref<128x384xf32, #tpu.memory_space<vmem>>, vector<128x384xf32>
    %cst_59 = arith.constant dense<0.000000e+00> : vector<2x384xf32>
    %233 = tpu.matmul %230, %232, %cst_59 {dimension_numbers = #tpu.dot_dimension_numbers<[1], [0], [0], [1], [0, 0, 1, 1], [], []>} : vector<2x128xf32>, vector<128x384xf32>, vector<2x384xf32> -> vector<2x384xf32>
    %234 = vector.extract_strided_slice %231 {offsets = [0, 0], sizes = [2, 128], strides = [1, 1]} : vector<2x384xf32> to vector<2x128xf32>
    %235 = vector.extract_strided_slice %233 {offsets = [0, 0], sizes = [2, 128], strides = [1, 1]} : vector<2x384xf32> to vector<2x128xf32>
    %236 = arith.addf %234, %235 : vector<2x128xf32>
    %237 = arith.negf %236 : vector<2x128xf32>
    %238 = math.exp %237 : vector<2x128xf32>
    %cst_60 = arith.constant 1.000000e+00 : f32
    %239 = vector.broadcast %cst_60 : f32 to vector<2x128xf32>
    %240 = arith.addf %239, %238 : vector<2x128xf32>
    %241 = arith.divf %239, %240 : vector<2x128xf32>
    %242 = vector.extract_strided_slice %231 {offsets = [0, 128], sizes = [2, 128], strides = [1, 1]} : vector<2x384xf32> to vector<2x128xf32>
    %243 = vector.extract_strided_slice %233 {offsets = [0, 128], sizes = [2, 128], strides = [1, 1]} : vector<2x384xf32> to vector<2x128xf32>
    %244 = arith.addf %242, %243 : vector<2x128xf32>
    %245 = arith.negf %244 : vector<2x128xf32>
    %246 = math.exp %245 : vector<2x128xf32>
    %cst_61 = arith.constant 1.000000e+00 : f32
    %247 = vector.broadcast %cst_61 : f32 to vector<2x128xf32>
    %248 = arith.addf %247, %246 : vector<2x128xf32>
    %249 = arith.divf %247, %248 : vector<2x128xf32>
    %250 = vector.extract_strided_slice %231 {offsets = [0, 256], sizes = [2, 128], strides = [1, 1]} : vector<2x384xf32> to vector<2x128xf32>
    %251 = vector.extract_strided_slice %233 {offsets = [0, 256], sizes = [2, 128], strides = [1, 1]} : vector<2x384xf32> to vector<2x128xf32>
    %252 = vector.broadcast %12 : vector<1x128xf32> to vector<2x128xf32>
    %253 = arith.addf %251, %252 : vector<2x128xf32>
    %254 = arith.mulf %241, %253 : vector<2x128xf32>
    %255 = arith.addf %250, %254 : vector<2x128xf32>
    %256 = math.tanh %255 : vector<2x128xf32>
    %cst_62 = arith.constant 1.000000e+00 : f32
    %257 = vector.broadcast %cst_62 : f32 to vector<2x128xf32>
    %258 = arith.subf %257, %249 : vector<2x128xf32>
    %259 = arith.mulf %258, %256 : vector<2x128xf32>
    %260 = arith.mulf %249, %230 : vector<2x128xf32>
    %261 = arith.addf %259, %260 : vector<2x128xf32>
    %c0_63 = arith.constant 0 : index
    %c0_64 = arith.constant 0 : index
    %262 = vector.load %arg8[%c0_63, %c0_64] : memref<2x128xf32, #tpu.memory_space<vmem>>, vector<2x128xf32>
    tpu.vector_store %arg8[%c0_63, %c0_64], %261 {strides = array<i32>} : memref<2x128xf32, #tpu.memory_space<vmem>>, vector<2x128xf32>,
    return
  }
}

</mosaic_0001>

<llo_original>
// kernel: encoder_forward.1
$region0: #{encoder_forward.1}
  #allocation0 [shape = 'u32[]', space=smem, size = 0x4, offset = 0x4, fixed_abs, tag = 'smem constant byte address 0x4 - core index']
  #allocation1 [shape = 'u32[72,128]{1,0:T(1,128)}', space=vmem, size = 0x9000, scoped, tag = 'internal scratch']
  %s0 = inlined_call_operand.vmem [shape: f32[16,2], index: 0, kind: input, shape index: {}]
  %s1 = inlined_call_operand.vmem [shape: f32[2,128], index: 1, kind: input, shape index: {}]
  %s2 = inlined_call_operand.vmem [shape: f32[1,128], index: 2, kind: input, shape index: {}]
  %s3 = inlined_call_operand.hbm [shape: f32[128,384], index: 3, kind: input, shape index: {}]
  %s4 = inlined_call_operand.hbm [shape: f32[128,384], index: 4, kind: input, shape index: {}]
  %s5 = inlined_call_operand.vmem [shape: f32[1,384], index: 5, kind: input, shape index: {}]
  %s6 = inlined_call_operand.vmem [shape: f32[1,128], index: 6, kind: input, shape index: {}]
  %s7 = inlined_call_operand.hbm [shape: f32[16,128], index: 7, kind: output, shape index: {0}]
  %s8 = inlined_call_operand.hbm [shape: f32[2,128], index: 8, kind: output, shape index: {1}]
  %9 = xla_tuple %s7, %s8
  %s10 = sld [smem:[#allocation0]]
  $region54: #{encoder_forward.1} parent=0
    _
  %s12 = ssub.s32 1, %s10
  %s13 = scalar_select 0, %s12, %s10
  $region1: #{encoder_forward.1} parent=0
    #allocation2 [shape = 'u8[196608]{0}', space=vmem, size = 0x30000, scoped, tag = 'input window, operand 3, single buffered']
    #allocation3 [shape = 's32[1]{0}', space=sflag, size = 0x4, scoped, tag = 'scoped memory for encoder_forward.1']
    #allocation4 [shape = 's32[1]{0}', space=sflag, size = 0x4, scoped, tag = 'scoped memory for encoder_forward.1']
    #allocation5 [shape = 'u8[196608]{0}', space=vmem, size = 0x30000, scoped, tag = 'input window, operand 4, single buffered']
    #allocation6 [shape = 's32[1]{0}', space=sflag, size = 0x4, scoped, tag = 'scoped memory for encoder_forward.1']
    #allocation7 [shape = 'u8[8192]{0}', space=vmem, size = 0x2000, scoped, tag = 'output window, operand 0, single buffered']
    #allocation8 [shape = 'u8[1024]{0}', space=vmem, size = 0x400, scoped, tag = 'output window, operand 1, single buffered']
    #allocation9 [shape = 's32[1]{0}', space=sflag, size = 0x4, scoped, tag = 'scoped memory for encoder_forward.1']
    %14 = vsyncpa [#allocation3], 0
    %15 = vsyncpa [#allocation6], 0
    %16 = vsyncpa [#allocation4], 0
    %17 = vsyncpa [#allocation9], 0
    // Predicated region
    $region2: #{encoder_forward.1} parent=1 // pred_check
      _
    $region3: #{encoder_forward.1} parent=1 // pred_check_branch
      %19 = sbr.rel (0) target = $region5
    $region4: #{encoder_forward.1} parent=1 // pred_region
      _
    $region5: #{encoder_forward.1} parent=1 // pred_fallthru
      _
    // Predicated region
    $region6: #{encoder_forward.1} parent=1 // pred_check
      _
    $region7: #{encoder_forward.1} parent=1 // pred_check_branch
      %21 = sbr.rel (0) target = $region9
    $region8: #{encoder_forward.1} parent=1 // pred_region
      _
    $region9: #{encoder_forward.1} parent=1 // pred_fallthru
      _
    // Predicated region
    $region10: #{encoder_forward.1} parent=1 // pred_check
      _
    $region11: #{encoder_forward.1} parent=1 // pred_check_branch
      %23 = sbr.rel (0) target = $region13
    $region12: #{encoder_forward.1} parent=1 // pred_region
      _
    $region13: #{encoder_forward.1} parent=1 // pred_fallthru
      _
    // Predicated region
    $region14: #{encoder_forward.1} parent=1 // pred_check
      _
    $region15: #{encoder_forward.1} parent=1 // pred_check_branch
      %25 = sbr.rel (0) target = $region17
    $region16: #{encoder_forward.1} parent=1 // pred_region
      %27 = vsyncadd [#allocation3], 0
      %s28 = sshll.u32 %s3, 4
      %s29 = int_to_ptr.hbm [resolvable:$true] %s28
      %s30 = sshll.u32 [#allocation2], 4
      %s31 = int_to_ptr.vmem [resolvable:$true] %s30
      %36 = dma.hbm_to_vmem [thread:$0]  %s29, 6144, %s31, [#allocation3], 384, 384, 24
    $region17: #{encoder_forward.1} parent=1 // pred_fallthru
      _
    // Predicated region
    $region18: #{encoder_forward.1} parent=1 // pred_check
      _
    $region19: #{encoder_forward.1} parent=1 // pred_check_branch
      %38 = sbr.rel (0) target = $region21
    $region20: #{encoder_forward.1} parent=1 // pred_region
      %40 = vsyncadd [#allocation6], 0
      %s41 = sshll.u32 %s4, 4
      %s42 = int_to_ptr.hbm [resolvable:$true] %s41
      %s43 = sshll.u32 [#allocation5], 4
      %s44 = int_to_ptr.vmem [resolvable:$true] %s43
      %49 = dma.hbm_to_vmem [thread:$0]  %s42, 6144, %s44, [#allocation6], 384, 384, 24
    $region21: #{encoder_forward.1} parent=1 // pred_fallthru
      _
    // Predicated region
    $region22: #{encoder_forward.1} parent=1 // pred_check
      _
    $region23: #{encoder_forward.1} parent=1 // pred_check_branch
      %51 = sbr.rel (0) target = $region25
    $region24: #{encoder_forward.1} parent=1 // pred_region
      _
    $region25: #{encoder_forward.1} parent=1 // pred_fallthru
      _
    // Predicated region
    $region26: #{encoder_forward.1} parent=1 // pred_check
      _
    $region27: #{encoder_forward.1} parent=1 // pred_check_branch
      %53 = sbr.rel (0) target = $region29
    $region28: #{encoder_forward.1} parent=1 // pred_region
      _
    $region29: #{encoder_forward.1} parent=1 // pred_fallthru
      _
    // Predicated region
    $region30: #{encoder_forward.1} parent=1 // pred_check
      _
    $region31: #{encoder_forward.1} parent=1 // pred_check_branch
      %55 = sbr.rel (0) target = $region33
    $region32: #{encoder_forward.1} parent=1 // pred_region
      %57 = dma.done [#allocation3], 6144
    $region33: #{encoder_forward.1} parent=1 // pred_fallthru
      _
    // Predicated region
    $region34: #{encoder_forward.1} parent=1 // pred_check
      _
    $region35: #{encoder_forward.1} parent=1 // pred_check_branch
      %59 = sbr.rel (0) target = $region37
    $region36: #{encoder_forward.1} parent=1 // pred_region
      %61 = dma.done [#allocation6], 6144
    $region37: #{encoder_forward.1} parent=1 // pred_fallthru
      _
    %v62 = vld [vmem:[%s0] sm:$0xff]
    %v63 = vld [vmem:[%s0 + $0x8] sm:$0xff]
    %v64 = vld [vmem:[%s1] sm:$0x3]
    %v65 = vld [vmem:[%s2] sm:$0x1]
    %v67 = vperm.slane %v65, 0
    %vm69 = vcmask 15360
    %v71 = vsel %vm69, %v62, 0
    %v74 = vsel %vm69, %v63, 0
    %vm76 = vcmask 1041408
    %v78 = vsel %vm76, %v64, 0
    %80 = vmatpush.msra.mxu0 0.0
    %81 = vmatpush.msra.mxu0 0.0
    %82 = vmatpush.msra.mxu0 0.0
    %83 = vmatpush.msra.mxu0 0.0
    %84 = vmatpush.msra.mxu0 0.0
    %85 = vmatpush.msra.mxu0 0.0
    %86 = vmatpush.msra.mxu0 0.0
    %87 = vmatpush.msra.mxu0 0.0
    %88 = vmatpush.msra.mxu0 0.0
    %89 = vmatpush.msra.mxu0 0.0
    %90 = vmatpush.msra.mxu0 0.0
    %91 = vmatpush.msra.mxu0 0.0
    %92 = vmatpush.msra.mxu0 0.0
    %93 = vmatpush.msra.mxu0 0.0
    %94 = vmatpush.msra.mxu0 0.0
    %95 = vmatpush.msra.mxu0 %v78
    %96 = vmatmul.f32.gmra.mxu0 %v71
    %v97 = vpop.f32.mrf.mxu0
    %v98 = vadd.f32 %v67, %v97
    %99 = vmatmul.f32.gmra.mxu0 %v74
    %v100 = vpop.f32.mrf.mxu0
    %v101 = vadd.f32 %v67, %v100
    %102 = vdwg.mxu0
    %103 = vst [vmem:[#allocation7] sm:$0xff] %v98
    %104 = vst [vmem:[#allocation7 + $0x8] sm:$0xff] %v101
    %v105 = vld [vmem:[#allocation2] sm:$0xff]
    %v106 = vld [vmem:[#allocation2 + $0x8] sm:$0xff]
    %v107 = vld [vmem:[#allocation2 + $0x10] sm:$0xff]
    %v108 = vld [vmem:[#allocation2 + $0x18] sm:$0xff]
    %v109 = vld [vmem:[#allocation2 + $0x20] sm:$0xff]
    %v110 = vld [vmem:[#allocation2 + $0x28] sm:$0xff]
    %v111 = vld [vmem:[#allocation2 + $0x30] sm:$0xff]
    %v112 = vld [vmem:[#allocation2 + $0x38] sm:$0xff]
    %v113 = vld [vmem:[#allocation2 + $0x40] sm:$0xff]
    %v114 = vld [vmem:[#allocation2 + $0x48] sm:$0xff]
    %v115 = vld [vmem:[#allocation2 + $0x50] sm:$0xff]
    %v116 = vld [vmem:[#allocation2 + $0x58] sm:$0xff]
    %v117 = vld [vmem:[#allocation2 + $0x60] sm:$0xff]
    %v118 = vld [vmem:[#allocation2 + $0x68] sm:$0xff]
    %v119 = vld [vmem:[#allocation2 + $0x70] sm:$0xff]
    %v120 = vld [vmem:[#allocation2 + $0x78] sm:$0xff]
    %v121 = vld [vmem:[#allocation2 + $0x80] sm:$0xff]
    %v122 = vld [vmem:[#allocation2 + $0x88] sm:$0xff]
    %v123 = vld [vmem:[#allocation2 + $0x90] sm:$0xff]
    %v124 = vld [vmem:[#allocation2 + $0x98] sm:$0xff]
    %v125 = vld [vmem:[#allocation2 + $0xa0] sm:$0xff]
    %v126 = vld [vmem:[#allocation2 + $0xa8] sm:$0xff]
    %v127 = vld [vmem:[#allocation2 + $0xb0] sm:$0xff]
    %v128 = vld [vmem:[#allocation2 + $0xb8] sm:$0xff]
    %v129 = vld [vmem:[#allocation2 + $0xc0] sm:$0xff]
    %v130 = vld [vmem:[#allocation2 + $0xc8] sm:$0xff]
    %v131 = vld [vmem:[#allocation2 + $0xd0] sm:$0xff]
    %v132 = vld [vmem:[#allocation2 + $0xd8] sm:$0xff]
    %v133 = vld [vmem:[#allocation2 + $0xe0] sm:$0xff]
    %v134 = vld [vmem:[#allocation2 + $0xe8] sm:$0xff]
    %v135 = vld [vmem:[#allocation2 + $0xf0] sm:$0xff]
    %v136 = vld [vmem:[#allocation2 + $0xf8] sm:$0xff]
    %v137 = vld [vmem:[#allocation2 + $0x100] sm:$0xff]
    %v138 = vld [vmem:[#allocation2 + $0x108] sm:$0xff]
    %v139 = vld [vmem:[#allocation2 + $0x110] sm:$0xff]
    %v140 = vld [vmem:[#allocation2 + $0x118] sm:$0xff]
    %v141 = vld [vmem:[#allocation2 + $0x120] sm:$0xff]
    %v142 = vld [vmem:[#allocation2 + $0x128] sm:$0xff]
    %v143 = vld [vmem:[#allocation2 + $0x130] sm:$0xff]
    %v144 = vld [vmem:[#allocation2 + $0x138] sm:$0xff]
    %v145 = vld [vmem:[#allocation2 + $0x140] sm:$0xff]
    %v146 = vld [vmem:[#allocation2 + $0x148] sm:$0xff]
    %v147 = vld [vmem:[#allocation2 + $0x150] sm:$0xff]
    %v148 = vld [vmem:[#allocation2 + $0x158] sm:$0xff]
    %v149 = vld [vmem:[#allocation2 + $0x160] sm:$0xff]
    %v150 = vld [vmem:[#allocation2 + $0x168] sm:$0xff]
    %v151 = vld [vmem:[#allocation2 + $0x170] sm:$0xff]
    %v152 = vld [vmem:[#allocation2 + $0x178] sm:$0xff]
    %v153 = vld [vmem:[%s5] sm:$0x7]
    %v155 = vperm.slane %v153, 0
    %v156 = vperm.slane %v153, 1
    %v157 = vperm.slane %v153, 2
    %161 = vmatpush.msra.mxu0 %v150
    %162 = vmatpush.msra.mxu0 %v147
    %163 = vmatpush.msra.mxu0 %v144
    %164 = vmatpush.msra.mxu0 %v141
    %165 = vmatpush.msra.mxu0 %v138
    %166 = vmatpush.msra.mxu0 %v135
    %167 = vmatpush.msra.mxu0 %v132
    %168 = vmatpush.msra.mxu0 %v129
    %169 = vmatpush.msra.mxu0 %v126
    %170 = vmatpush.msra.mxu0 %v123
    %171 = vmatpush.msra.mxu0 %v120
    %172 = vmatpush.msra.mxu0 %v117
    %173 = vmatpush.msra.mxu0 %v114
    %174 = vmatpush.msra.mxu0 %v111
    %175 = vmatpush.msra.mxu0 %v108
    %176 = vmatpush.msra.mxu0 %v105
    %177 = vmatmul.f32.gmra.mxu0 %v98
    %v178 = vpop.f32.mrf.mxu0
    %v179 = vadd.f32 %v155, %v178
    %180 = vmatmul.f32.gmra.mxu0 %v101
    %v181 = vpop.f32.mrf.mxu0
    %v182 = vadd.f32 %v155, %v181
    %183 = vdwg.mxu0
    %184 = vmatpush.msra.mxu0 %v151
    %185 = vmatpush.msra.mxu0 %v148
    %186 = vmatpush.msra.mxu0 %v145
    %187 = vmatpush.msra.mxu0 %v142
    %188 = vmatpush.msra.mxu0 %v139
    %189 = vmatpush.msra.mxu0 %v136
    %190 = vmatpush.msra.mxu0 %v133
    %191 = vmatpush.msra.mxu0 %v130
    %192 = vmatpush.msra.mxu0 %v127
    %193 = vmatpush.msra.mxu0 %v124
    %194 = vmatpush.msra.mxu0 %v121
    %195 = vmatpush.msra.mxu0 %v118
    %196 = vmatpush.msra.mxu0 %v115
    %197 = vmatpush.msra.mxu0 %v112
    %198 = vmatpush.msra.mxu0 %v109
    %199 = vmatpush.msra.mxu0 %v106
    %200 = vmatmul.f32.gmra.mxu0 %v98
    %v201 = vpop.f32.mrf.mxu0
    %v202 = vadd.f32 %v156, %v201
    %203 = vmatmul.f32.gmra.mxu0 %v101
    %v204 = vpop.f32.mrf.mxu0
    %v205 = vadd.f32 %v156, %v204
    %206 = vdwg.mxu0
    %207 = vmatpush.msra.mxu0 %v152
    %208 = vmatpush.msra.mxu0 %v149
    %209 = vmatpush.msra.mxu0 %v146
    %210 = vmatpush.msra.mxu0 %v143
    %211 = vmatpush.msra.mxu0 %v140
    %212 = vmatpush.msra.mxu0 %v137
    %213 = vmatpush.msra.mxu0 %v134
    %214 = vmatpush.msra.mxu0 %v131
    %215 = vmatpush.msra.mxu0 %v128
    %216 = vmatpush.msra.mxu0 %v125
    %217 = vmatpush.msra.mxu0 %v122
    %218 = vmatpush.msra.mxu0 %v119
    %219 = vmatpush.msra.mxu0 %v116
    %220 = vmatpush.msra.mxu0 %v113
    %221 = vmatpush.msra.mxu0 %v110
    %222 = vmatpush.msra.mxu0 %v107
    %223 = vmatmul.f32.gmra.mxu0 %v98
    %v224 = vpop.f32.mrf.mxu0
    %v225 = vadd.f32 %v157, %v224
    %226 = vmatmul.f32.gmra.mxu0 %v101
    %v227 = vpop.f32.mrf.mxu0
    %v228 = vadd.f32 %v157, %v227
    %229 = vdwg.mxu0
    %v230 = vld [vmem:[%s6] sm:$0x1]
    %v231 = vld [vmem:[#allocation5] sm:$0xff]
    %v232 = vld [vmem:[#allocation5 + $0x8] sm:$0xff]
    %v233 = vld [vmem:[#allocation5 + $0x10] sm:$0xff]
    %v234 = vld [vmem:[#allocation5 + $0x18] sm:$0xff]
    %v235 = vld [vmem:[#allocation5 + $0x20] sm:$0xff]
    %v236 = vld [vmem:[#allocation5 + $0x28] sm:$0xff]
    %v237 = vld [vmem:[#allocation5 + $0x30] sm:$0xff]
    %v238 = vld [vmem:[#allocation5 + $0x38] sm:$0xff]
    %v239 = vld [vmem:[#allocation5 + $0x40] sm:$0xff]
    %v240 = vld [vmem:[#allocation5 + $0x48] sm:$0xff]
    %v241 = vld [vmem:[#allocation5 + $0x50] sm:$0xff]
    %v242 = vld [vmem:[#allocation5 + $0x58] sm:$0xff]
    %v243 = vld [vmem:[#allocation5 + $0x60] sm:$0xff]
    %v244 = vld [vmem:[#allocation5 + $0x68] sm:$0xff]
    %v245 = vld [vmem:[#allocation5 + $0x70] sm:$0xff]
    %v246 = vld [vmem:[#allocation5 + $0x78] sm:$0xff]
    %v247 = vld [vmem:[#allocation5 + $0x80] sm:$0xff]
    %v248 = vld [vmem:[#allocation5 + $0x88] sm:$0xff]
    %v249 = vld [vmem:[#allocation5 + $0x90] sm:$0xff]
    %v250 = vld [vmem:[#allocation5 + $0x98] sm:$0xff]
    %v251 = vld [vmem:[#allocation5 + $0xa0] sm:$0xff]
    %v252 = vld [vmem:[#allocation5 + $0xa8] sm:$0xff]
    %v253 = vld [vmem:[#allocation5 + $0xb0] sm:$0xff]
    %v254 = vld [vmem:[#allocation5 + $0xb8] sm:$0xff]
    %v255 = vld [vmem:[#allocation5 + $0xc0] sm:$0xff]
    %v256 = vld [vmem:[#allocation5 + $0xc8] sm:$0xff]
    %v257 = vld [vmem:[#allocation5 + $0xd0] sm:$0xff]
    %v258 = vld [vmem:[#allocation5 + $0xd8] sm:$0xff]
    %v259 = vld [vmem:[#allocation5 + $0xe0] sm:$0xff]
    %v260 = vld [vmem:[#allocation5 + $0xe8] sm:$0xff]
    %v261 = vld [vmem:[#allocation5 + $0xf0] sm:$0xff]
    %v262 = vld [vmem:[#allocation5 + $0xf8] sm:$0xff]
    %v263 = vld [vmem:[#allocation5 + $0x100] sm:$0xff]
    %v264 = vld [vmem:[#allocation5 + $0x108] sm:$0xff]
    %v265 = vld [vmem:[#allocation5 + $0x110] sm:$0xff]
    %v266 = vld [vmem:[#allocation5 + $0x118] sm:$0xff]
    %v267 = vld [vmem:[#allocation5 + $0x120] sm:$0xff]
    %v268 = vld [vmem:[#allocation5 + $0x128] sm:$0xff]
    %v269 = vld [vmem:[#allocation5 + $0x130] sm:$0xff]
    %v270 = vld [vmem:[#allocation5 + $0x138] sm:$0xff]
    %v271 = vld [vmem:[#allocation5 + $0x140] sm:$0xff]
    %v272 = vld [vmem:[#allocation5 + $0x148] sm:$0xff]
    %v273 = vld [vmem:[#allocation5 + $0x150] sm:$0xff]
    %v274 = vld [vmem:[#allocation5 + $0x158] sm:$0xff]
    %v275 = vld [vmem:[#allocation5 + $0x160] sm:$0xff]
    %v276 = vld [vmem:[#allocation5 + $0x168] sm:$0xff]
    %v277 = vld [vmem:[#allocation5 + $0x170] sm:$0xff]
    %v278 = vld [vmem:[#allocation5 + $0x178] sm:$0xff]
    %279 = vmatpush.msra.mxu0 %v276
    %280 = vmatpush.msra.mxu0 %v273
    %281 = vmatpush.msra.mxu0 %v270
    %282 = vmatpush.msra.mxu0 %v267
    %283 = vmatpush.msra.mxu0 %v264
    %284 = vmatpush.msra.mxu0 %v261
    %285 = vmatpush.msra.mxu0 %v258
    %286 = vmatpush.msra.mxu0 %v255
    %287 = vmatpush.msra.mxu0 %v252
    %288 = vmatpush.msra.mxu0 %v249
    %289 = vmatpush.msra.mxu0 %v246
    %290 = vmatpush.msra.mxu0 %v243
    %291 = vmatpush.msra.mxu0 %v240
    %292 = vmatpush.msra.mxu0 %v237
    %293 = vmatpush.msra.mxu0 %v234
    %294 = vmatpush.msra.mxu0 %v231
    %295 = vmatmul.f32.gmra.mxu0 0.0
    %v296 = vpop.f32.mrf.mxu0
    %v297 = vadd.f32 0.0, %v296
    %298 = vdwg.mxu0
    %299 = vmatpush.msra.mxu0 %v277
    %300 = vmatpush.msra.mxu0 %v274
    %301 = vmatpush.msra.mxu0 %v271
    %302 = vmatpush.msra.mxu0 %v268
    %303 = vmatpush.msra.mxu0 %v265
    %304 = vmatpush.msra.mxu0 %v262
    %305 = vmatpush.msra.mxu0 %v259
    %306 = vmatpush.msra.mxu0 %v256
    %307 = vmatpush.msra.mxu0 %v253
    %308 = vmatpush.msra.mxu0 %v250
    %309 = vmatpush.msra.mxu0 %v247
    %310 = vmatpush.msra.mxu0 %v244
    %311 = vmatpush.msra.mxu0 %v241
    %312 = vmatpush.msra.mxu0 %v238
    %313 = vmatpush.msra.mxu0 %v235
    %314 = vmatpush.msra.mxu0 %v232
    %315 = vmatmul.f32.gmra.mxu0 0.0
    %v316 = vpop.f32.mrf.mxu0
    %v317 = vadd.f32 0.0, %v316
    %318 = vdwg.mxu0
    %319 = vmatpush.msra.mxu0 %v278
    %320 = vmatpush.msra.mxu0 %v275
    %321 = vmatpush.msra.mxu0 %v272
    %322 = vmatpush.msra.mxu0 %v269
    %323 = vmatpush.msra.mxu0 %v266
    %324 = vmatpush.msra.mxu0 %v263
    %325 = vmatpush.msra.mxu0 %v260
    %326 = vmatpush.msra.mxu0 %v257
    %327 = vmatpush.msra.mxu0 %v254
    %328 = vmatpush.msra.mxu0 %v251
    %329 = vmatpush.msra.mxu0 %v248
    %330 = vmatpush.msra.mxu0 %v245
    %331 = vmatpush.msra.mxu0 %v242
    %332 = vmatpush.msra.mxu0 %v239
    %333 = vmatpush.msra.mxu0 %v236
    %334 = vmatpush.msra.mxu0 %v233
    %335 = vmatmul.f32.gmra.mxu0 0.0
    %v336 = vpop.f32.mrf.mxu0
    %v337 = vadd.f32 0.0, %v336
    %338 = vdwg.mxu0
    %v339 = vadd.f32 %v179, %v297
    %v340 = vxor.u32 %v339, 2147483648
    %v341 = vmul.f32 %v340, 1.442695
    %v342 = vpow.pop %v341
    %v343 = vadd.f32 %v342, 1.0
    %v344 = vrcp.pop %v343
    %v345 = vmul.f32 %v343, %v344
    %v346 = vsub.f32 1.0, %v345
    %v347 = vmul.f32 %v344, %v346
    %v348 = vadd.f32 %v344, %v347
    %vm349 = vweird.f32 %v343
    %vm350 = vweird.f32 %v344
    %vm351 = vmor %vm349, %vm350
    %v352 = vsel %vm351, %v344, %v348
    %v353 = vand.u32 2147483647, %v343
    %vm354 = vcmp.eq.f32.partialorder %v353, 8.507059e+37
    %v355 = vand.u32 %v343, 2147483648
    %v356 = vor.u32 1.1754944e-38, %v355
    %v357 = vsel %vm354, %v356, %v352
    %v358 = vmul.f32 1.0, %v357
    %v359 = vadd.f32 %v202, %v317
    %v360 = vxor.u32 %v359, 2147483648
    %v361 = vmul.f32 %v360, 1.442695
    %v362 = vpow.pop %v361
    %v363 = vadd.f32 %v362, 1.0
    %v364 = vrcp.pop %v363
    %v365 = vmul.f32 %v363, %v364
    %v366 = vsub.f32 1.0, %v365
    %v367 = vmul.f32 %v364, %v366
    %v368 = vadd.f32 %v364, %v367
    %vm369 = vweird.f32 %v363
    %vm370 = vweird.f32 %v364
    %vm371 = vmor %vm369, %vm370
    %v372 = vsel %vm371, %v364, %v368
    %v373 = vand.u32 2147483647, %v363
    %vm374 = vcmp.eq.f32.partialorder %v373, 8.507059e+37
    %v375 = vand.u32 %v363, 2147483648
    %v376 = vor.u32 1.1754944e-38, %v375
    %v377 = vsel %vm374, %v376, %v372
    %v378 = vmul.f32 1.0, %v377
    %v380 = vperm.slane %v230, 0
    %v382 = vadd.f32 %v337, %v380
    %v383 = vmul.f32 %v358, %v382
    %v384 = vadd.f32 %v225, %v383
    %v385 = vtanh.pop %v384
    %v386 = vsub.f32 1.0, %v378
    %v387 = vmul.f32 %v386, %v385
    %v388 = vmul.f32 %v378, 0.0
    %v389 = vadd.f32 %v387, %v388
    %390 = vmatpush.msra.mxu0 %v276
    %391 = vmatpush.msra.mxu0 %v273
    %392 = vmatpush.msra.mxu0 %v270
    %393 = vmatpush.msra.mxu0 %v267
    %394 = vmatpush.msra.mxu0 %v264
    %395 = vmatpush.msra.mxu0 %v261
    %396 = vmatpush.msra.mxu0 %v258
    %397 = vmatpush.msra.mxu0 %v255
    %398 = vmatpush.msra.mxu0 %v252
    %399 = vmatpush.msra.mxu0 %v249
    %400 = vmatpush.msra.mxu0 %v246
    %401 = vmatpush.msra.mxu0 %v243
    %402 = vmatpush.msra.mxu0 %v240
    %403 = vmatpush.msra.mxu0 %v237
    %404 = vmatpush.msra.mxu0 %v234
    %405 = vmatpush.msra.mxu0 %v231
    %406 = vmatmul.f32.gmra.mxu0 %v389
    %v407 = vpop.f32.mrf.mxu0
    %v408 = vadd.f32 0.0, %v407
    %409 = vdwg.mxu0
    %410 = vmatpush.msra.mxu0 %v277
    %411 = vmatpush.msra.mxu0 %v274
    %412 = vmatpush.msra.mxu0 %v271
    %413 = vmatpush.msra.mxu0 %v268
    %414 = vmatpush.msra.mxu0 %v265
    %415 = vmatpush.msra.mxu0 %v262
    %416 = vmatpush.msra.mxu0 %v259
    %417 = vmatpush.msra.mxu0 %v256
    %418 = vmatpush.msra.mxu0 %v253
    %419 = vmatpush.msra.mxu0 %v250
    %420 = vmatpush.msra.mxu0 %v247
    %421 = vmatpush.msra.mxu0 %v244
    %422 = vmatpush.msra.mxu0 %v241
    %423 = vmatpush.msra.mxu0 %v238
    %424 = vmatpush.msra.mxu0 %v235
    %425 = vmatpush.msra.mxu0 %v232
    %426 = vmatmul.f32.gmra.mxu0 %v389
    %v427 = vpop.f32.mrf.mxu0
    %v428 = vadd.f32 0.0, %v427
    %429 = vdwg.mxu0
    %430 = vmatpush.msra.mxu0 %v278
    %431 = vmatpush.msra.mxu0 %v275
    %432 = vmatpush.msra.mxu0 %v272
    %433 = vmatpush.msra.mxu0 %v269
    %434 = vmatpush.msra.mxu0 %v266
    %435 = vmatpush.msra.mxu0 %v263
    %436 = vmatpush.msra.mxu0 %v260
    %437 = vmatpush.msra.mxu0 %v257
    %438 = vmatpush.msra.mxu0 %v254
    %439 = vmatpush.msra.mxu0 %v251
    %440 = vmatpush.msra.mxu0 %v248
    %441 = vmatpush.msra.mxu0 %v245
    %442 = vmatpush.msra.mxu0 %v242
    %443 = vmatpush.msra.mxu0 %v239
    %444 = vmatpush.msra.mxu0 %v236
    %445 = vmatpush.msra.mxu0 %v233
    %446 = vmatmul.f32.gmra.mxu0 %v389
    %v447 = vpop.f32.mrf.mxu0
    %v448 = vadd.f32 0.0, %v447
    %449 = vdwg.mxu0
    %v451 = vrot.slane %v408, 6
    %v453 = vadd.f32 %v179, %v451
    %v454 = vxor.u32 %v453, 2147483648
    %v455 = vmul.f32 %v454, 1.442695
    %v456 = vpow.pop %v455
    %v457 = vadd.f32 %v456, 1.0
    %v458 = vrcp.pop %v457
    %v459 = vmul.f32 %v457, %v458
    %v460 = vsub.f32 1.0, %v459
    %v461 = vmul.f32 %v458, %v460
    %v462 = vadd.f32 %v458, %v461
    %vm463 = vweird.f32 %v457
    %vm464 = vweird.f32 %v458
    %vm465 = vmor %vm463, %vm464
    %v466 = vsel %vm465, %v458, %v462
    %v467 = vand.u32 2147483647, %v457
    %vm468 = vcmp.eq.f32.partialorder %v467, 8.507059e+37
    %v469 = vand.u32 %v457, 2147483648
    %v470 = vor.u32 1.1754944e-38, %v469
    %v471 = vsel %vm468, %v470, %v466
    %v472 = vmul.f32 1.0, %v471
    %v474 = vrot.slane %v428, 6
    %v476 = vadd.f32 %v202, %v474
    %v477 = vxor.u32 %v476, 2147483648
    %v478 = vmul.f32 %v477, 1.442695
    %v479 = vpow.pop %v478
    %v480 = vadd.f32 %v479, 1.0
    %v481 = vrcp.pop %v480
    %v482 = vmul.f32 %v480, %v481
    %v483 = vsub.f32 1.0, %v482
    %v484 = vmul.f32 %v481, %v483
    %v485 = vadd.f32 %v481, %v484
    %vm486 = vweird.f32 %v480
    %vm487 = vweird.f32 %v481
    %vm488 = vmor %vm486, %vm487
    %v489 = vsel %vm488, %v481, %v485
    %v490 = vand.u32 2147483647, %v480
    %vm491 = vcmp.eq.f32.partialorder %v490, 8.507059e+37
    %v492 = vand.u32 %v480, 2147483648
    %v493 = vor.u32 1.1754944e-38, %v492
    %v494 = vsel %vm491, %v493, %v489
    %v495 = vmul.f32 1.0, %v494
    %v496 = vadd.f32 %v448, %v380
    %v498 = vrot.slane %v496, 6
    %v500 = vmul.f32 %v472, %v498
    %v501 = vadd.f32 %v225, %v500
    %v502 = vtanh.pop %v501
    %v503 = vsub.f32 1.0, %v495
    %v504 = vmul.f32 %v503, %v502
    %v506 = vrot.slane %v389, 6
    %v508 = vmul.f32 %v495, %v506
    %v509 = vadd.f32 %v504, %v508
    %v511 = vrot.slane %v509, 2
    %513 = vmatpush.msra.mxu0 %v276
    %514 = vmatpush.msra.mxu0 %v273
    %515 = vmatpush.msra.mxu0 %v270
    %516 = vmatpush.msra.mxu0 %v267
    %517 = vmatpush.msra.mxu0 %v264
    %518 = vmatpush.msra.mxu0 %v261
    %519 = vmatpush.msra.mxu0 %v258
    %520 = vmatpush.msra.mxu0 %v255
    %521 = vmatpush.msra.mxu0 %v252
    %522 = vmatpush.msra.mxu0 %v249
    %523 = vmatpush.msra.mxu0 %v246
    %524 = vmatpush.msra.mxu0 %v243
    %525 = vmatpush.msra.mxu0 %v240
    %526 = vmatpush.msra.mxu0 %v237
    %527 = vmatpush.msra.mxu0 %v234
    %528 = vmatpush.msra.mxu0 %v231
    %529 = vmatmul.f32.gmra.mxu0 %v511
    %v530 = vpop.f32.mrf.mxu0
    %v531 = vadd.f32 0.0, %v530
    %532 = vdwg.mxu0
    %533 = vmatpush.msra.mxu0 %v277
    %534 = vmatpush.msra.mxu0 %v274
    %535 = vmatpush.msra.mxu0 %v271
    %536 = vmatpush.msra.mxu0 %v268
    %537 = vmatpush.msra.mxu0 %v265
    %538 = vmatpush.msra.mxu0 %v262
    %539 = vmatpush.msra.mxu0 %v259
    %540 = vmatpush.msra.mxu0 %v256
    %541 = vmatpush.msra.mxu0 %v253
    %542 = vmatpush.msra.mxu0 %v250
    %543 = vmatpush.msra.mxu0 %v247
    %544 = vmatpush.msra.mxu0 %v244
    %545 = vmatpush.msra.mxu0 %v241
    %546 = vmatpush.msra.mxu0 %v238
    %547 = vmatpush.msra.mxu0 %v235
    %548 = vmatpush.msra.mxu0 %v232
    %549 = vmatmul.f32.gmra.mxu0 %v511
    %v550 = vpop.f32.mrf.mxu0
    %v551 = vadd.f32 0.0, %v550
    %552 = vdwg.mxu0
    %553 = vmatpush.msra.mxu0 %v278
    %554 = vmatpush.msra.mxu0 %v275
    %555 = vmatpush.msra.mxu0 %v272
    %556 = vmatpush.msra.mxu0 %v269
    %557 = vmatpush.msra.mxu0 %v266
    %558 = vmatpush.msra.mxu0 %v263
    %559 = vmatpush.msra.mxu0 %v260
    %560 = vmatpush.msra.mxu0 %v257
    %561 = vmatpush.msra.mxu0 %v254
    %562 = vmatpush.msra.mxu0 %v251
    %563 = vmatpush.msra.mxu0 %v248
    %564 = vmatpush.msra.mxu0 %v245
    %565 = vmatpush.msra.mxu0 %v242
    %566 = vmatpush.msra.mxu0 %v239
    %567 = vmatpush.msra.mxu0 %v236
    %568 = vmatpush.msra.mxu0 %v233
    %569 = vmatmul.f32.gmra.mxu0 %v511
    %v570 = vpop.f32.mrf.mxu0
    %v571 = vadd.f32 0.0, %v570
    %572 = vdwg.mxu0
    %v574 = vrot.slane %v531, 4
    %v576 = vadd.f32 %v179, %v574
    %v577 = vxor.u32 %v576, 2147483648
    %v578 = vmul.f32 %v577, 1.442695
    %v579 = vpow.pop %v578
    %v580 = vadd.f32 %v579, 1.0
    %v581 = vrcp.pop %v580
    %v582 = vmul.f32 %v580, %v581
    %v583 = vsub.f32 1.0, %v582
    %v584 = vmul.f32 %v581, %v583
    %v585 = vadd.f32 %v581, %v584
    %vm586 = vweird.f32 %v580
    %vm587 = vweird.f32 %v581
    %vm588 = vmor %vm586, %vm587
    %v589 = vsel %vm588, %v581, %v585
    %v590 = vand.u32 2147483647, %v580
    %vm591 = vcmp.eq.f32.partialorder %v590, 8.507059e+37
    %v592 = vand.u32 %v580, 2147483648
    %v593 = vor.u32 1.1754944e-38, %v592
    %v594 = vsel %vm591, %v593, %v589
    %v595 = vmul.f32 1.0, %v594
    %v597 = vrot.slane %v551, 4
    %v599 = vadd.f32 %v202, %v597
    %v600 = vxor.u32 %v599, 2147483648
    %v601 = vmul.f32 %v600, 1.442695
    %v602 = vpow.pop %v601
    %v603 = vadd.f32 %v602, 1.0
    %v604 = vrcp.pop %v603
    %v605 = vmul.f32 %v603, %v604
    %v606 = vsub.f32 1.0, %v605
    %v607 = vmul.f32 %v604, %v606
    %v608 = vadd.f32 %v604, %v607
    %vm609 = vweird.f32 %v603
    %vm610 = vweird.f32 %v604
    %vm611 = vmor %vm609, %vm610
    %v612 = vsel %vm611, %v604, %v608
    %v613 = vand.u32 2147483647, %v603
    %vm614 = vcmp.eq.f32.partialorder %v613, 8.507059e+37
    %v615 = vand.u32 %v603, 2147483648
    %v616 = vor.u32 1.1754944e-38, %v615
    %v617 = vsel %vm614, %v616, %v612
    %v618 = vmul.f32 1.0, %v617
    %v619 = vadd.f32 %v571, %v380
    %v621 = vrot.slane %v619, 4
    %v623 = vmul.f32 %v595, %v621
    %v624 = vadd.f32 %v225, %v623
    %v625 = vtanh.pop %v624
    %v626 = vsub.f32 1.0, %v618
    %v627 = vmul.f32 %v626, %v625
    %v628 = vrot.slane %v509, 6
    %v630 = vmul.f32 %v618, %v628
    %v631 = vadd.f32 %v627, %v630
    %v633 = vrot.slane %v631, 4
    %635 = vmatpush.msra.mxu0 %v276
    %636 = vmatpush.msra.mxu0 %v273
    %637 = vmatpush.msra.mxu0 %v270
    %638 = vmatpush.msra.mxu0 %v267
    %639 = vmatpush.msra.mxu0 %v264
    %640 = vmatpush.msra.mxu0 %v261
    %641 = vmatpush.msra.mxu0 %v258
    %642 = vmatpush.msra.mxu0 %v255
    %643 = vmatpush.msra.mxu0 %v252
    %644 = vmatpush.msra.mxu0 %v249
    %645 = vmatpush.msra.mxu0 %v246
    %646 = vmatpush.msra.mxu0 %v243
    %647 = vmatpush.msra.mxu0 %v240
    %648 = vmatpush.msra.mxu0 %v237
    %649 = vmatpush.msra.mxu0 %v234
    %650 = vmatpush.msra.mxu0 %v231
    %651 = vmatmul.f32.gmra.mxu0 %v633
    %v652 = vpop.f32.mrf.mxu0
    %v653 = vadd.f32 0.0, %v652
    %654 = vdwg.mxu0
    %655 = vmatpush.msra.mxu0 %v277
    %656 = vmatpush.msra.mxu0 %v274
    %657 = vmatpush.msra.mxu0 %v271
    %658 = vmatpush.msra.mxu0 %v268
    %659 = vmatpush.msra.mxu0 %v265
    %660 = vmatpush.msra.mxu0 %v262
    %661 = vmatpush.msra.mxu0 %v259
    %662 = vmatpush.msra.mxu0 %v256
    %663 = vmatpush.msra.mxu0 %v253
    %664 = vmatpush.msra.mxu0 %v250
    %665 = vmatpush.msra.mxu0 %v247
    %666 = vmatpush.msra.mxu0 %v244
    %667 = vmatpush.msra.mxu0 %v241
    %668 = vmatpush.msra.mxu0 %v238
    %669 = vmatpush.msra.mxu0 %v235
    %670 = vmatpush.msra.mxu0 %v232
    %671 = vmatmul.f32.gmra.mxu0 %v633
    %v672 = vpop.f32.mrf.mxu0
    %v673 = vadd.f32 0.0, %v672
    %674 = vdwg.mxu0
    %675 = vmatpush.msra.mxu0 %v278
    %676 = vmatpush.msra.mxu0 %v275
    %677 = vmatpush.msra.mxu0 %v272
    %678 = vmatpush.msra.mxu0 %v269
    %679 = vmatpush.msra.mxu0 %v266
    %680 = vmatpush.msra.mxu0 %v263
    %681 = vmatpush.msra.mxu0 %v260
    %682 = vmatpush.msra.mxu0 %v257
    %683 = vmatpush.msra.mxu0 %v254
    %684 = vmatpush.msra.mxu0 %v251
    %685 = vmatpush.msra.mxu0 %v248
    %686 = vmatpush.msra.mxu0 %v245
    %687 = vmatpush.msra.mxu0 %v242
    %688 = vmatpush.msra.mxu0 %v239
    %689 = vmatpush.msra.mxu0 %v236
    %690 = vmatpush.msra.mxu0 %v233
    %691 = vmatmul.f32.gmra.mxu0 %v633
    %v692 = vpop.f32.mrf.mxu0
    %v693 = vadd.f32 0.0, %v692
    %694 = vdwg.mxu0
    %v696 = vrot.slane %v653, 2
    %v698 = vadd.f32 %v179, %v696
    %v699 = vxor.u32 %v698, 2147483648
    %v700 = vmul.f32 %v699, 1.442695
    %v701 = vpow.pop %v700
    %v702 = vadd.f32 %v701, 1.0
    %v703 = vrcp.pop %v702
    %v704 = vmul.f32 %v702, %v703
    %v705 = vsub.f32 1.0, %v704
    %v706 = vmul.f32 %v703, %v705
    %v707 = vadd.f32 %v703, %v706
    %vm708 = vweird.f32 %v702
    %vm709 = vweird.f32 %v703
    %vm710 = vmor %vm708, %vm709
    %v711 = vsel %vm710, %v703, %v707
    %v712 = vand.u32 2147483647, %v702
    %vm713 = vcmp.eq.f32.partialorder %v712, 8.507059e+37
    %v714 = vand.u32 %v702, 2147483648
    %v715 = vor.u32 1.1754944e-38, %v714
    %v716 = vsel %vm713, %v715, %v711
    %v717 = vmul.f32 1.0, %v716
    %v719 = vrot.slane %v673, 2
    %v721 = vadd.f32 %v202, %v719
    %v722 = vxor.u32 %v721, 2147483648
    %v723 = vmul.f32 %v722, 1.442695
    %v724 = vpow.pop %v723
    %v725 = vadd.f32 %v724, 1.0
    %v726 = vrcp.pop %v725
    %v727 = vmul.f32 %v725, %v726
    %v728 = vsub.f32 1.0, %v727
    %v729 = vmul.f32 %v726, %v728
    %v730 = vadd.f32 %v726, %v729
    %vm731 = vweird.f32 %v725
    %vm732 = vweird.f32 %v726
    %vm733 = vmor %vm731, %vm732
    %v734 = vsel %vm733, %v726, %v730
    %v735 = vand.u32 2147483647, %v725
    %vm736 = vcmp.eq.f32.partialorder %v735, 8.507059e+37
    %v737 = vand.u32 %v725, 2147483648
    %v738 = vor.u32 1.1754944e-38, %v737
    %v739 = vsel %vm736, %v738, %v734
    %v740 = vmul.f32 1.0, %v739
    %v741 = vadd.f32 %v693, %v380
    %v743 = vrot.slane %v741, 2
    %v745 = vmul.f32 %v717, %v743
    %v746 = vadd.f32 %v225, %v745
    %v747 = vtanh.pop %v746
    %v748 = vsub.f32 1.0, %v740
    %v749 = vmul.f32 %v748, %v747
    %v750 = vrot.slane %v631, 6
    %v752 = vmul.f32 %v740, %v750
    %v753 = vadd.f32 %v749, %v752
    %v755 = vrot.slane %v753, 6
    %757 = vmatpush.msra.mxu0 %v276
    %758 = vmatpush.msra.mxu0 %v273
    %759 = vmatpush.msra.mxu0 %v270
    %760 = vmatpush.msra.mxu0 %v267
    %761 = vmatpush.msra.mxu0 %v264
    %762 = vmatpush.msra.mxu0 %v261
    %763 = vmatpush.msra.mxu0 %v258
    %764 = vmatpush.msra.mxu0 %v255
    %765 = vmatpush.msra.mxu0 %v252
    %766 = vmatpush.msra.mxu0 %v249
    %767 = vmatpush.msra.mxu0 %v246
    %768 = vmatpush.msra.mxu0 %v243
    %769 = vmatpush.msra.mxu0 %v240
    %770 = vmatpush.msra.mxu0 %v237
    %771 = vmatpush.msra.mxu0 %v234
    %772 = vmatpush.msra.mxu0 %v231
    %773 = vmatmul.f32.gmra.mxu0 %v755
    %v774 = vpop.f32.mrf.mxu0
    %v775 = vadd.f32 0.0, %v774
    %776 = vdwg.mxu0
    %777 = vmatpush.msra.mxu0 %v277
    %778 = vmatpush.msra.mxu0 %v274
    %779 = vmatpush.msra.mxu0 %v271
    %780 = vmatpush.msra.mxu0 %v268
    %781 = vmatpush.msra.mxu0 %v265
    %782 = vmatpush.msra.mxu0 %v262
    %783 = vmatpush.msra.mxu0 %v259
    %784 = vmatpush.msra.mxu0 %v256
    %785 = vmatpush.msra.mxu0 %v253
    %786 = vmatpush.msra.mxu0 %v250
    %787 = vmatpush.msra.mxu0 %v247
    %788 = vmatpush.msra.mxu0 %v244
    %789 = vmatpush.msra.mxu0 %v241
    %790 = vmatpush.msra.mxu0 %v238
    %791 = vmatpush.msra.mxu0 %v235
    %792 = vmatpush.msra.mxu0 %v232
    %793 = vmatmul.f32.gmra.mxu0 %v755
    %v794 = vpop.f32.mrf.mxu0
    %v795 = vadd.f32 0.0, %v794
    %796 = vdwg.mxu0
    %797 = vmatpush.msra.mxu0 %v278
    %798 = vmatpush.msra.mxu0 %v275
    %799 = vmatpush.msra.mxu0 %v272
    %800 = vmatpush.msra.mxu0 %v269
    %801 = vmatpush.msra.mxu0 %v266
    %802 = vmatpush.msra.mxu0 %v263
    %803 = vmatpush.msra.mxu0 %v260
    %804 = vmatpush.msra.mxu0 %v257
    %805 = vmatpush.msra.mxu0 %v254
    %806 = vmatpush.msra.mxu0 %v251
    %807 = vmatpush.msra.mxu0 %v248
    %808 = vmatpush.msra.mxu0 %v245
    %809 = vmatpush.msra.mxu0 %v242
    %810 = vmatpush.msra.mxu0 %v239
    %811 = vmatpush.msra.mxu0 %v236
    %812 = vmatpush.msra.mxu0 %v233
    %813 = vmatmul.f32.gmra.mxu0 %v755
    %v814 = vpop.f32.mrf.mxu0
    %v815 = vadd.f32 0.0, %v814
    %816 = vdwg.mxu0
    %v817 = vadd.f32 %v182, %v775
    %v818 = vxor.u32 %v817, 2147483648
    %v819 = vmul.f32 %v818, 1.442695
    %v820 = vpow.pop %v819
    %v821 = vadd.f32 %v820, 1.0
    %v822 = vrcp.pop %v821
    %v823 = vmul.f32 %v821, %v822
    %v824 = vsub.f32 1.0, %v823
    %v825 = vmul.f32 %v822, %v824
    %v826 = vadd.f32 %v822, %v825
    %vm827 = vweird.f32 %v821
    %vm828 = vweird.f32 %v822
    %vm829 = vmor %vm827, %vm828
    %v830 = vsel %vm829, %v822, %v826
    %v831 = vand.u32 2147483647, %v821
    %vm832 = vcmp.eq.f32.partialorder %v831, 8.507059e+37
    %v833 = vand.u32 %v821, 2147483648
    %v834 = vor.u32 1.1754944e-38, %v833
    %v835 = vsel %vm832, %v834, %v830
    %v836 = vmul.f32 1.0, %v835
    %v837 = vadd.f32 %v205, %v795
    %v838 = vxor.u32 %v837, 2147483648
    %v839 = vmul.f32 %v838, 1.442695
    %v840 = vpow.pop %v839
    %v841 = vadd.f32 %v840, 1.0
    %v842 = vrcp.pop %v841
    %v843 = vmul.f32 %v841, %v842
    %v844 = vsub.f32 1.0, %v843
    %v845 = vmul.f32 %v842, %v844
    %v846 = vadd.f32 %v842, %v845
    %vm847 = vweird.f32 %v841
    %vm848 = vweird.f32 %v842
    %vm849 = vmor %vm847, %vm848
    %v850 = vsel %vm849, %v842, %v846
    %v851 = vand.u32 2147483647, %v841
    %vm852 = vcmp.eq.f32.partialorder %v851, 8.507059e+37
    %v853 = vand.u32 %v841, 2147483648
    %v854 = vor.u32 1.1754944e-38, %v853
    %v855 = vsel %vm852, %v854, %v850
    %v856 = vmul.f32 1.0, %v855
    %v857 = vadd.f32 %v815, %v380
    %v858 = vmul.f32 %v836, %v857
    %v859 = vadd.f32 %v228, %v858
    %v860 = vtanh.pop %v859
    %v861 = vsub.f32 1.0, %v856
    %v862 = vmul.f32 %v861, %v860
    %v863 = vmul.f32 %v856, %v755
    %v864 = vadd.f32 %v862, %v863
    %865 = vmatpush.msra.mxu0 %v276
    %866 = vmatpush.msra.mxu0 %v273
    %867 = vmatpush.msra.mxu0 %v270
    %868 = vmatpush.msra.mxu0 %v267
    %869 = vmatpush.msra.mxu0 %v264
    %870 = vmatpush.msra.mxu0 %v261
    %871 = vmatpush.msra.mxu0 %v258
    %872 = vmatpush.msra.mxu0 %v255
    %873 = vmatpush.msra.mxu0 %v252
    %874 = vmatpush.msra.mxu0 %v249
    %875 = vmatpush.msra.mxu0 %v246
    %876 = vmatpush.msra.mxu0 %v243
    %877 = vmatpush.msra.mxu0 %v240
    %878 = vmatpush.msra.mxu0 %v237
    %879 = vmatpush.msra.mxu0 %v234
    %880 = vmatpush.msra.mxu0 %v231
    %881 = vmatmul.f32.gmra.mxu0 %v864
    %v882 = vpop.f32.mrf.mxu0
    %v883 = vadd.f32 0.0, %v882
    %884 = vdwg.mxu0
    %885 = vmatpush.msra.mxu0 %v277
    %886 = vmatpush.msra.mxu0 %v274
    %887 = vmatpush.msra.mxu0 %v271
    %888 = vmatpush.msra.mxu0 %v268
    %889 = vmatpush.msra.mxu0 %v265
    %890 = vmatpush.msra.mxu0 %v262
    %891 = vmatpush.msra.mxu0 %v259
    %892 = vmatpush.msra.mxu0 %v256
    %893 = vmatpush.msra.mxu0 %v253
    %894 = vmatpush.msra.mxu0 %v250
    %895 = vmatpush.msra.mxu0 %v247
    %896 = vmatpush.msra.mxu0 %v244
    %897 = vmatpush.msra.mxu0 %v241
    %898 = vmatpush.msra.mxu0 %v238
    %899 = vmatpush.msra.mxu0 %v235
    %900 = vmatpush.msra.mxu0 %v232
    %901 = vmatmul.f32.gmra.mxu0 %v864
    %v902 = vpop.f32.mrf.mxu0
    %v903 = vadd.f32 0.0, %v902
    %904 = vdwg.mxu0
    %905 = vmatpush.msra.mxu0 %v278
    %906 = vmatpush.msra.mxu0 %v275
    %907 = vmatpush.msra.mxu0 %v272
    %908 = vmatpush.msra.mxu0 %v269
    %909 = vmatpush.msra.mxu0 %v266
    %910 = vmatpush.msra.mxu0 %v263
    %911 = vmatpush.msra.mxu0 %v260
    %912 = vmatpush.msra.mxu0 %v257
    %913 = vmatpush.msra.mxu0 %v254
    %914 = vmatpush.msra.mxu0 %v251
    %915 = vmatpush.msra.mxu0 %v248
    %916 = vmatpush.msra.mxu0 %v245
    %917 = vmatpush.msra.mxu0 %v242
    %918 = vmatpush.msra.mxu0 %v239
    %919 = vmatpush.msra.mxu0 %v236
    %920 = vmatpush.msra.mxu0 %v233
    %921 = vmatmul.f32.gmra.mxu0 %v864
    %v922 = vpop.f32.mrf.mxu0
    %v923 = vadd.f32 0.0, %v922
    %924 = vdwg.mxu0
    %v926 = vrot.slane %v883, 6
    %v928 = vadd.f32 %v182, %v926
    %v929 = vxor.u32 %v928, 2147483648
    %v930 = vmul.f32 %v929, 1.442695
    %v931 = vpow.pop %v930
    %v932 = vadd.f32 %v931, 1.0
    %v933 = vrcp.pop %v932
    %v934 = vmul.f32 %v932, %v933
    %v935 = vsub.f32 1.0, %v934
    %v936 = vmul.f32 %v933, %v935
    %v937 = vadd.f32 %v933, %v936
    %vm938 = vweird.f32 %v932
    %vm939 = vweird.f32 %v933
    %vm940 = vmor %vm938, %vm939
    %v941 = vsel %vm940, %v933, %v937
    %v942 = vand.u32 2147483647, %v932
    %vm943 = vcmp.eq.f32.partialorder %v942, 8.507059e+37
    %v944 = vand.u32 %v932, 2147483648
    %v945 = vor.u32 1.1754944e-38, %v944
    %v946 = vsel %vm943, %v945, %v941
    %v947 = vmul.f32 1.0, %v946
    %v949 = vrot.slane %v903, 6
    %v951 = vadd.f32 %v205, %v949
    %v952 = vxor.u32 %v951, 2147483648
    %v953 = vmul.f32 %v952, 1.442695
    %v954 = vpow.pop %v953
    %v955 = vadd.f32 %v954, 1.0
    %v956 = vrcp.pop %v955
    %v957 = vmul.f32 %v955, %v956
    %v958 = vsub.f32 1.0, %v957
    %v959 = vmul.f32 %v956, %v958
    %v960 = vadd.f32 %v956, %v959
    %vm961 = vweird.f32 %v955
    %vm962 = vweird.f32 %v956
    %vm963 = vmor %vm961, %vm962
    %v964 = vsel %vm963, %v956, %v960
    %v965 = vand.u32 2147483647, %v955
    %vm966 = vcmp.eq.f32.partialorder %v965, 8.507059e+37
    %v967 = vand.u32 %v955, 2147483648
    %v968 = vor.u32 1.1754944e-38, %v967
    %v969 = vsel %vm966, %v968, %v964
    %v970 = vmul.f32 1.0, %v969
    %v971 = vadd.f32 %v923, %v380
    %v973 = vrot.slane %v971, 6
    %v975 = vmul.f32 %v947, %v973
    %v976 = vadd.f32 %v228, %v975
    %v977 = vtanh.pop %v976
    %v978 = vsub.f32 1.0, %v970
    %v979 = vmul.f32 %v978, %v977
    %v981 = vrot.slane %v864, 6
    %v983 = vmul.f32 %v970, %v981
    %v984 = vadd.f32 %v979, %v983
    %v986 = vrot.slane %v984, 2
    %988 = vmatpush.msra.mxu0 %v276
    %989 = vmatpush.msra.mxu0 %v273
    %990 = vmatpush.msra.mxu0 %v270
    %991 = vmatpush.msra.mxu0 %v267
    %992 = vmatpush.msra.mxu0 %v264
    %993 = vmatpush.msra.mxu0 %v261
    %994 = vmatpush.msra.mxu0 %v258
    %995 = vmatpush.msra.mxu0 %v255
    %996 = vmatpush.msra.mxu0 %v252
    %997 = vmatpush.msra.mxu0 %v249
    %998 = vmatpush.msra.mxu0 %v246
    %999 = vmatpush.msra.mxu0 %v243
    %1000 = vmatpush.msra.mxu0 %v240
    %1001 = vmatpush.msra.mxu0 %v237
    %1002 = vmatpush.msra.mxu0 %v234
    %1003 = vmatpush.msra.mxu0 %v231
    %1004 = vmatmul.f32.gmra.mxu0 %v986
    %v1005 = vpop.f32.mrf.mxu0
    %v1006 = vadd.f32 0.0, %v1005
    %1007 = vdwg.mxu0
    %1008 = vmatpush.msra.mxu0 %v277
    %1009 = vmatpush.msra.mxu0 %v274
    %1010 = vmatpush.msra.mxu0 %v271
    %1011 = vmatpush.msra.mxu0 %v268
    %1012 = vmatpush.msra.mxu0 %v265
    %1013 = vmatpush.msra.mxu0 %v262
    %1014 = vmatpush.msra.mxu0 %v259
    %1015 = vmatpush.msra.mxu0 %v256
    %1016 = vmatpush.msra.mxu0 %v253
    %1017 = vmatpush.msra.mxu0 %v250
    %1018 = vmatpush.msra.mxu0 %v247
    %1019 = vmatpush.msra.mxu0 %v244
    %1020 = vmatpush.msra.mxu0 %v241
    %1021 = vmatpush.msra.mxu0 %v238
    %1022 = vmatpush.msra.mxu0 %v235
    %1023 = vmatpush.msra.mxu0 %v232
    %1024 = vmatmul.f32.gmra.mxu0 %v986
    %v1025 = vpop.f32.mrf.mxu0
    %v1026 = vadd.f32 0.0, %v1025
    %1027 = vdwg.mxu0
    %1028 = vmatpush.msra.mxu0 %v278
    %1029 = vmatpush.msra.mxu0 %v275
    %1030 = vmatpush.msra.mxu0 %v272
    %1031 = vmatpush.msra.mxu0 %v269
    %1032 = vmatpush.msra.mxu0 %v266
    %1033 = vmatpush.msra.mxu0 %v263
    %1034 = vmatpush.msra.mxu0 %v260
    %1035 = vmatpush.msra.mxu0 %v257
    %1036 = vmatpush.msra.mxu0 %v254
    %1037 = vmatpush.msra.mxu0 %v251
    %1038 = vmatpush.msra.mxu0 %v248
    %1039 = vmatpush.msra.mxu0 %v245
    %1040 = vmatpush.msra.mxu0 %v242
    %1041 = vmatpush.msra.mxu0 %v239
    %1042 = vmatpush.msra.mxu0 %v236
    %1043 = vmatpush.msra.mxu0 %v233
    %1044 = vmatmul.f32.gmra.mxu0 %v986
    %v1045 = vpop.f32.mrf.mxu0
    %v1046 = vadd.f32 0.0, %v1045
    %1047 = vdwg.mxu0
    %v1049 = vrot.slane %v1006, 4
    %v1051 = vadd.f32 %v182, %v1049
    %v1052 = vxor.u32 %v1051, 2147483648
    %v1053 = vmul.f32 %v1052, 1.442695
    %v1054 = vpow.pop %v1053
    %v1055 = vadd.f32 %v1054, 1.0
    %v1056 = vrcp.pop %v1055
    %v1057 = vmul.f32 %v1055, %v1056
    %v1058 = vsub.f32 1.0, %v1057
    %v1059 = vmul.f32 %v1056, %v1058
    %v1060 = vadd.f32 %v1056, %v1059
    %vm1061 = vweird.f32 %v1055
    %vm1062 = vweird.f32 %v1056
    %vm1063 = vmor %vm1061, %vm1062
    %v1064 = vsel %vm1063, %v1056, %v1060
    %v1065 = vand.u32 2147483647, %v1055
    %vm1066 = vcmp.eq.f32.partialorder %v1065, 8.507059e+37
    %v1067 = vand.u32 %v1055, 2147483648
    %v1068 = vor.u32 1.1754944e-38, %v1067
    %v1069 = vsel %vm1066, %v1068, %v1064
    %v1070 = vmul.f32 1.0, %v1069
    %v1072 = vrot.slane %v1026, 4
    %v1074 = vadd.f32 %v205, %v1072
    %v1075 = vxor.u32 %v1074, 2147483648
    %v1076 = vmul.f32 %v1075, 1.442695
    %v1077 = vpow.pop %v1076
    %v1078 = vadd.f32 %v1077, 1.0
    %v1079 = vrcp.pop %v1078
    %v1080 = vmul.f32 %v1078, %v1079
    %v1081 = vsub.f32 1.0, %v1080
    %v1082 = vmul.f32 %v1079, %v1081
    %v1083 = vadd.f32 %v1079, %v1082
    %vm1084 = vweird.f32 %v1078
    %vm1085 = vweird.f32 %v1079
    %vm1086 = vmor %vm1084, %vm1085
    %v1087 = vsel %vm1086, %v1079, %v1083
    %v1088 = vand.u32 2147483647, %v1078
    %vm1089 = vcmp.eq.f32.partialorder %v1088, 8.507059e+37
    %v1090 = vand.u32 %v1078, 2147483648
    %v1091 = vor.u32 1.1754944e-38, %v1090
    %v1092 = vsel %vm1089, %v1091, %v1087
    %v1093 = vmul.f32 1.0, %v1092
    %v1094 = vadd.f32 %v1046, %v380
    %v1096 = vrot.slane %v1094, 4
    %v1098 = vmul.f32 %v1070, %v1096
    %v1099 = vadd.f32 %v228, %v1098
    %v1100 = vtanh.pop %v1099
    %v1101 = vsub.f32 1.0, %v1093
    %v1102 = vmul.f32 %v1101, %v1100
    %v1103 = vrot.slane %v984, 6
    %v1105 = vmul.f32 %v1093, %v1103
    %v1106 = vadd.f32 %v1102, %v1105
    %v1108 = vrot.slane %v1106, 4
    %1110 = vmatpush.msra.mxu0 %v276
    %1111 = vmatpush.msra.mxu0 %v273
    %1112 = vmatpush.msra.mxu0 %v270
    %1113 = vmatpush.msra.mxu0 %v267
    %1114 = vmatpush.msra.mxu0 %v264
    %1115 = vmatpush.msra.mxu0 %v261
    %1116 = vmatpush.msra.mxu0 %v258
    %1117 = vmatpush.msra.mxu0 %v255
    %1118 = vmatpush.msra.mxu0 %v252
    %1119 = vmatpush.msra.mxu0 %v249
    %1120 = vmatpush.msra.mxu0 %v246
    %1121 = vmatpush.msra.mxu0 %v243
    %1122 = vmatpush.msra.mxu0 %v240
    %1123 = vmatpush.msra.mxu0 %v237
    %1124 = vmatpush.msra.mxu0 %v234
    %1125 = vmatpush.msra.mxu0 %v231
    %1126 = vmatmul.f32.gmra.mxu0 %v1108
    %v1127 = vpop.f32.mrf.mxu0
    %v1128 = vadd.f32 0.0, %v1127
    %1129 = vdwg.mxu0
    %1130 = vmatpush.msra.mxu0 %v277
    %1131 = vmatpush.msra.mxu0 %v274
    %1132 = vmatpush.msra.mxu0 %v271
    %1133 = vmatpush.msra.mxu0 %v268
    %1134 = vmatpush.msra.mxu0 %v265
    %1135 = vmatpush.msra.mxu0 %v262
    %1136 = vmatpush.msra.mxu0 %v259
    %1137 = vmatpush.msra.mxu0 %v256
    %1138 = vmatpush.msra.mxu0 %v253
    %1139 = vmatpush.msra.mxu0 %v250
    %1140 = vmatpush.msra.mxu0 %v247
    %1141 = vmatpush.msra.mxu0 %v244
    %1142 = vmatpush.msra.mxu0 %v241
    %1143 = vmatpush.msra.mxu0 %v238
    %1144 = vmatpush.msra.mxu0 %v235
    %1145 = vmatpush.msra.mxu0 %v232
    %1146 = vmatmul.f32.gmra.mxu0 %v1108
    %v1147 = vpop.f32.mrf.mxu0
    %v1148 = vadd.f32 0.0, %v1147
    %1149 = vdwg.mxu0
    %1150 = vmatpush.msra.mxu0 %v278
    %1151 = vmatpush.msra.mxu0 %v275
    %1152 = vmatpush.msra.mxu0 %v272
    %1153 = vmatpush.msra.mxu0 %v269
    %1154 = vmatpush.msra.mxu0 %v266
    %1155 = vmatpush.msra.mxu0 %v263
    %1156 = vmatpush.msra.mxu0 %v260
    %1157 = vmatpush.msra.mxu0 %v257
    %1158 = vmatpush.msra.mxu0 %v254
    %1159 = vmatpush.msra.mxu0 %v251
    %1160 = vmatpush.msra.mxu0 %v248
    %1161 = vmatpush.msra.mxu0 %v245
    %1162 = vmatpush.msra.mxu0 %v242
    %1163 = vmatpush.msra.mxu0 %v239
    %1164 = vmatpush.msra.mxu0 %v236
    %1165 = vmatpush.msra.mxu0 %v233
    %1166 = vmatmul.f32.gmra.mxu0 %v1108
    %v1167 = vpop.f32.mrf.mxu0
    %v1168 = vadd.f32 0.0, %v1167
    %1169 = vdwg.mxu0
    %v1171 = vrot.slane %v1128, 2
    %v1173 = vadd.f32 %v182, %v1171
    %v1174 = vxor.u32 %v1173, 2147483648
    %v1175 = vmul.f32 %v1174, 1.442695
    %v1176 = vpow.pop %v1175
    %v1177 = vadd.f32 %v1176, 1.0
    %v1178 = vrcp.pop %v1177
    %v1179 = vmul.f32 %v1177, %v1178
    %v1180 = vsub.f32 1.0, %v1179
    %v1181 = vmul.f32 %v1178, %v1180
    %v1182 = vadd.f32 %v1178, %v1181
    %vm1183 = vweird.f32 %v1177
    %vm1184 = vweird.f32 %v1178
    %vm1185 = vmor %vm1183, %vm1184
    %v1186 = vsel %vm1185, %v1178, %v1182
    %v1187 = vand.u32 2147483647, %v1177
    %vm1188 = vcmp.eq.f32.partialorder %v1187, 8.507059e+37
    %v1189 = vand.u32 %v1177, 2147483648
    %v1190 = vor.u32 1.1754944e-38, %v1189
    %v1191 = vsel %vm1188, %v1190, %v1186
    %v1192 = vmul.f32 1.0, %v1191
    %v1194 = vrot.slane %v1148, 2
    %v1196 = vadd.f32 %v205, %v1194
    %v1197 = vxor.u32 %v1196, 2147483648
    %v1198 = vmul.f32 %v1197, 1.442695
    %v1199 = vpow.pop %v1198
    %v1200 = vadd.f32 %v1199, 1.0
    %v1201 = vrcp.pop %v1200
    %v1202 = vmul.f32 %v1200, %v1201
    %v1203 = vsub.f32 1.0, %v1202
    %v1204 = vmul.f32 %v1201, %v1203
    %v1205 = vadd.f32 %v1201, %v1204
    %vm1206 = vweird.f32 %v1200
    %vm1207 = vweird.f32 %v1201
    %vm1208 = vmor %vm1206, %vm1207
    %v1209 = vsel %vm1208, %v1201, %v1205
    %v1210 = vand.u32 2147483647, %v1200
    %vm1211 = vcmp.eq.f32.partialorder %v1210, 8.507059e+37
    %v1212 = vand.u32 %v1200, 2147483648
    %v1213 = vor.u32 1.1754944e-38, %v1212
    %v1214 = vsel %vm1211, %v1213, %v1209
    %v1215 = vmul.f32 1.0, %v1214
    %v1216 = vadd.f32 %v1168, %v380
    %v1218 = vrot.slane %v1216, 2
    %v1220 = vmul.f32 %v1192, %v1218
    %v1221 = vadd.f32 %v228, %v1220
    %v1222 = vtanh.pop %v1221
    %v1223 = vsub.f32 1.0, %v1215
    %v1224 = vmul.f32 %v1223, %v1222
    %v1225 = vrot.slane %v1106, 6
    %v1227 = vmul.f32 %v1215, %v1225
    %v1228 = vadd.f32 %v1224, %v1227
    %1229 = vst [vmem:[#allocation8 - $0x6] sm:$0xc0] %v1228
    // Predicated region
    $region38: #{encoder_forward.1} parent=1 // pred_check
      _
    $region39: #{encoder_forward.1} parent=1 // pred_check_branch
      %1231 = sbr.rel (0) target = $region41
    $region40: #{encoder_forward.1} parent=1 // pred_region
      %1233 = vsyncadd [#allocation4], 0
      %s1234 = sshll.u32 [#allocation7], 4
      %s1235 = int_to_ptr.vmem [resolvable:$true] %s1234
      %s1236 = sshll.u32 %s7, 4
      %s1237 = int_to_ptr.hbm [resolvable:$true] %s1236
      %1242 = dma.vmem_to_hbm [thread:$0]  %s1235, 256, %s1237, [#allocation4], 128, 128, 8
    $region41: #{encoder_forward.1} parent=1 // pred_fallthru
      _
    // Predicated region
    $region42: #{encoder_forward.1} parent=1 // pred_check
      _
    $region43: #{encoder_forward.1} parent=1 // pred_check_branch
      %1244 = sbr.rel (0) target = $region45
    $region44: #{encoder_forward.1} parent=1 // pred_region
      %1246 = vsyncadd [#allocation9], 0
      %s1248 = sshll.u32 [#allocation8], 4
      %s1249 = int_to_ptr.vmem [resolvable:$true] %s1248
      %s1250 = sshll.u32 %s8, 4
      %s1251 = int_to_ptr.hbm [resolvable:$true] %s1250
      %1253 = dma.vmem_to_hbm [thread:$0]  %s1249, 32, %s1251, [#allocation9]
    $region45: #{encoder_forward.1} parent=1 // pred_fallthru
      _
    // Predicated region
    $region46: #{encoder_forward.1} parent=1 // pred_check
      _
    $region47: #{encoder_forward.1} parent=1 // pred_check_branch
      %1255 = sbr.rel (0) target = $region49
    $region48: #{encoder_forward.1} parent=1 // pred_region
      %1257 = dma.done [#allocation4], 256
    $region49: #{encoder_forward.1} parent=1 // pred_fallthru
      _
    // Predicated region
    $region50: #{encoder_forward.1} parent=1 // pred_check
      _
    $region51: #{encoder_forward.1} parent=1 // pred_check_branch
      %1259 = sbr.rel (0) target = $region53
    $region52: #{encoder_forward.1} parent=1 // pred_region
      %1261 = dma.done [#allocation9], 32
    $region53: #{encoder_forward.1} parent=1 // pred_fallthru
      _
    %1262 = vsyncpa [#allocation3], 1
    %1263 = vsyncpa [#allocation6], 1
    %1264 = vsyncpa [#allocation4], 1
    %1265 = vsyncpa [#allocation9], 1

</llo_original>
